<compile_context>
chip_gen: v5e
topology: v5e:2x2
jax: 0.10.0
libtpu: 0.0.40
codegen_flags: <defaults>
</compile_context>

<pallas_src>
import jax
import jax.numpy as jnp
from jax.experimental import pallas as pl
from jax.experimental.pallas import tpu as pltpu

# ---- model hyper-parameters (small, but consistent with the module) ----
D_MODEL = 32
NHEAD = 4
DIM_FF = 64
HEAD_DIM = D_MODEL // NHEAD
EPS = 1e-5


def _layernorm(x, gamma, beta):
    mu = jnp.mean(x, axis=-1, keepdims=True)
    xc = x - mu
    var = jnp.mean(xc * xc, axis=-1, keepdims=True)
    return xc * jax.lax.rsqrt(var + EPS) * gamma + beta


def decoder_layer_kernel(q_rep_ref, k_rep_ref, v_rep_ref, tgt_ref,
                         wq_ref, bq_ref, wk_ref, bk_ref, wv_ref, bv_ref,
                         wo_ref, bo_ref,
                         w1_ref, b1_ref, w2_ref, b2_ref,
                         g2_ref, be2_ref, g3_ref, be3_ref,
                         out_ref):
    # ---- head-batched cross-attention; batch dim b = n*NHEAD + h ----
    qh = jnp.einsum('bte,bed->btd', q_rep_ref[...], wq_ref[...],
                    preferred_element_type=jnp.float32) + bq_ref[...]
    kh = jnp.einsum('bse,bed->bsd', k_rep_ref[...], wk_ref[...],
                    preferred_element_type=jnp.float32) + bk_ref[...]
    vh = jnp.einsum('bse,bed->bsd', v_rep_ref[...], wv_ref[...],
                    preferred_element_type=jnp.float32) + bv_ref[...]

    qh = qh * (HEAD_DIM ** -0.5)
    scores = jnp.einsum('btd,bsd->bts', qh, kh,
                        preferred_element_type=jnp.float32)           # (N*H, T, S)
    scores = scores - jnp.max(scores, axis=-1, keepdims=True)
    p = jnp.exp(scores)
    denom = jnp.sum(p, axis=-1, keepdims=True)
    p = p * pl.reciprocal(denom, approx=True)                          # EUP reciprocal

    ctx = jnp.einsum('bts,bsd->btd', p, vh,
                     preferred_element_type=jnp.float32)               # (N*H, T, Dh)

    # per-head slice of the out-projection, then sum over heads: (N*H,T,E) -> (N,T,E)
    proj = jnp.einsum('btd,bde->bte', ctx, wo_ref[...],
                      preferred_element_type=jnp.float32)
    nh_b, t_len, e_dim = proj.shape
    n_batch = nh_b // NHEAD
    proj = proj.reshape(n_batch, NHEAD, t_len, e_dim)                  # leading-dim split only
    attn = proj[:, 0]
    for h in range(1, NHEAD):                                          # static unroll, H=4
        attn = attn + proj[:, h]
    attn = attn + bo_ref[...]                                          # (N, T, E)

    # ---- residual + norm2   (dropout2 = identity) ----
    x = _layernorm(tgt_ref[...] + attn, g2_ref[...], be2_ref[...])     # (N, T, E)

    # ---- FFN: linear2(dropout(relu(linear1(x))))  (dropout = identity) ----
    h1 = jnp.einsum('nte,nef->ntf', x, w1_ref[...],
                    preferred_element_type=jnp.float32) + b1_ref[...]
    h1 = jnp.maximum(h1, 0.0)
    ff = jnp.einsum('ntf,nfe->nte', h1, w2_ref[...],
                    preferred_element_type=jnp.float32) + b2_ref[...]

    # ---- residual + norm3   (dropout3 = identity) ----
    out_ref[...] = _layernorm(x + ff, g3_ref[...], be3_ref[...])


@jax.jit
def transformer_decoder_layer(tgt, memory, params, pos=None, query_pos=None):
    """tgt: (T, N, E), memory: (S, N, E)  ->  (T, N, E)   (PyTorch convention)."""
    T, N, E = tgt.shape
    S = memory.shape[0]
    H, Dh = NHEAD, HEAD_DIM
    if query_pos is None:
        query_pos = jnp.zeros_like(tgt)
    if pos is None:
        pos = jnp.zeros_like(memory)

    # batch-major activations; head-replicated copies for the batched attention einsums
    q_in = jnp.transpose(tgt + query_pos, (1, 0, 2))     # (N, T, E)  with_pos_embed(tgt, query_pos)
    k_in = jnp.transpose(memory + pos, (1, 0, 2))        # (N, S, E)  with_pos_embed(memory, pos)
    mem_b = jnp.transpose(memory, (1, 0, 2))             # (N, S, E)
    tgt_b = jnp.transpose(tgt, (1, 0, 2))                # (N, T, E)
    q_rep = jnp.repeat(q_in, H, axis=0)                  # (N*H, T, E)
    k_rep = jnp.repeat(k_in, H, axis=0)                  # (N*H, S, E)
    v_rep = jnp.repeat(mem_b, H, axis=0)                 # (N*H, S, E)

    # per-head weight splits, tiled over the batch (done once, wrapper side)
    w_in = params["in_proj_weight"]                      # (3E, E)
    b_in = params["in_proj_bias"]                        # (3E,)

    def head_split_w(w):                                 # (E, E) -> (N*H, E, Dh)
        return jnp.tile(w.reshape(H, Dh, E).transpose(0, 2, 1), (N, 1, 1))

    def head_split_b(b):                                 # (E,) -> (N*H, 1, Dh)
        return jnp.tile(b.reshape(H, 1, Dh), (N, 1, 1))

    wq, bq = head_split_w(w_in[:E]), head_split_b(b_in[:E])
    wk, bk = head_split_w(w_in[E:2 * E]), head_split_b(b_in[E:2 * E])
    wv, bv = head_split_w(w_in[2 * E:]), head_split_b(b_in[2 * E:])
    wo = jnp.tile(params["out_proj_weight"].T.reshape(H, Dh, E), (N, 1, 1))  # (N*H, Dh, E)
    bo = params["out_proj_bias"].reshape(1, 1, E)

    w1 = jnp.tile(params["linear1_weight"].T[None], (N, 1, 1))   # (N, E, FF)
    b1 = params["linear1_bias"].reshape(1, 1, DIM_FF)
    w2 = jnp.tile(params["linear2_weight"].T[None], (N, 1, 1))   # (N, FF, E)
    b2 = params["linear2_bias"].reshape(1, 1, E)
    g2 = params["norm2_weight"].reshape(1, 1, E)
    be2 = params["norm2_bias"].reshape(1, 1, E)
    g3 = params["norm3_weight"].reshape(1, 1, E)
    be3 = params["norm3_bias"].reshape(1, 1, E)

    inputs = [q_rep, k_rep, v_rep, tgt_b, wq, bq, wk, bk, wv, bv, wo, bo,
              w1, b1, w2, b2, g2, be2, g3, be3]

    vmem = pl.BlockSpec(memory_space=pltpu.MemorySpace.VMEM)     # whole array in VMEM
    out = pl.pallas_call(                                        # single invocation, no grid
        decoder_layer_kernel,
        out_shape=jax.ShapeDtypeStruct((N, T, E), jnp.float32),
        in_specs=[vmem] * len(inputs),
        out_specs=vmem,
    )(*inputs)

    return jnp.transpose(out, (1, 0, 2))                          # back to (T, N, E)


# ---------------- pure-JAX reference (mirrors PyTorch semantics) -------------
def reference(tgt, memory, params, pos, query_pos):
    E = tgt.shape[-1]
    q_in = tgt + query_pos
    k_in = memory + pos
    w_in, b_in = params["in_proj_weight"], params["in_proj_bias"]
    q = q_in @ w_in[:E].T + b_in[:E]
    k = k_in @ w_in[E:2 * E].T + b_in[E:2 * E]
    v = memory @ w_in[2 * E:].T + b_in[2 * E:]
    T, N, _ = q.shape
    S = k.shape[0]

    def split(x, L):
        return x.reshape(L, N, NHEAD, HEAD_DIM).transpose(1, 2, 0, 3)  # (N,H,L,Dh)

    qh = split(q, T) / (HEAD_DIM ** 0.5)
    kh, vh = split(k, S), split(v, S)
    p = jax.nn.softmax(jnp.einsum('nhtd,nhsd->nhts', qh, kh), axis=-1)
    o = jnp.einsum('nhts,nhsd->nhtd', p, vh).transpose(2, 0, 1, 3).reshape(T, N, E)
    attn_out = o @ params["out_proj_weight"].T + params["out_proj_bias"]

    def ln(x, g, b):
        mu = x.mean(-1, keepdims=True)
        var = ((x - mu) ** 2).mean(-1, keepdims=True)
        return (x - mu) / jnp.sqrt(var + EPS) * g + b

    x = ln(tgt + attn_out, params["norm2_weight"], params["norm2_bias"])
    h1 = jnp.maximum(x @ params["linear1_weight"].T + params["linear1_bias"], 0.0)
    ff = h1 @ params["linear2_weight"].T + params["linear2_bias"]
    return ln(x + ff, params["norm3_weight"], params["norm3_bias"])


def init_params(key):
    ks = jax.random.split(key, 8)
    s = 0.05
    return {
        "in_proj_weight": jax.random.normal(ks[0], (3 * D_MODEL, D_MODEL), jnp.float32) * s,
        "in_proj_bias": jax.random.normal(ks[1], (3 * D_MODEL,), jnp.float32) * s,
        "out_proj_weight": jax.random.normal(ks[2], (D_MODEL, D_MODEL), jnp.float32) * s,
        "out_proj_bias": jax.random.normal(ks[3], (D_MODEL,), jnp.float32) * s,
        "linear1_weight": jax.random.normal(ks[4], (DIM_FF, D_MODEL), jnp.float32) * s,
        "linear1_bias": jax.random.normal(ks[5], (DIM_FF,), jnp.float32) * s,
        "linear2_weight": jax.random.normal(ks[6], (D_MODEL, DIM_FF), jnp.float32) * s,
        "linear2_bias": jax.random.normal(ks[7], (D_MODEL,), jnp.float32) * s,
        # LayerNorm default init (weight=1, bias=0), as in nn.LayerNorm
        "norm2_weight": jnp.ones((D_MODEL,), jnp.float32),
        "norm2_bias": jnp.zeros((D_MODEL,), jnp.float32),
        "norm3_weight": jnp.ones((D_MODEL,), jnp.float32),
        "norm3_bias": jnp.zeros((D_MODEL,), jnp.float32),
    }


if __name__ == "__main__":
    key = jax.random.PRNGKey(0)
    k_t, k_m, k_p, k_qp, k_param = jax.random.split(key, 5)

    T, S, N = 8, 8, 2                      # target seq, memory seq, batch
    tgt = jax.random.normal(k_t, (T, N, D_MODEL), jnp.float32)
    memory = jax.random.normal(k_m, (S, N, D_MODEL), jnp.float32)
    pos = jax.random.normal(k_p, (S, N, D_MODEL), jnp.float32)
    query_pos = jax.random.normal(k_qp, (T, N, D_MODEL), jnp.float32)
    params = init_params(k_param)

    out = transformer_decoder_layer(tgt, memory, params, pos=pos, query_pos=query_pos)
    out = jax.block_until_ready(out)

    ref = reference(tgt, memory, params, pos, query_pos)
    assert out.shape == (T, N, D_MODEL)
    # tolerance accounts for the approximate EUP reciprocal in the softmax denominator
    assert jnp.allclose(out, ref, atol=2e-3, rtol=2e-3), "mismatch vs. reference"

    print("KERNEL_OK")
</pallas_src>

<mosaic_0001>
module attributes {stable_mosaic.version = 11 : i64} {
  func.func @decoder_layer_kernel(%arg0: memref<8x8x32xf32, #tpu.memory_space<vmem>>, %arg1: memref<8x8x32xf32, #tpu.memory_space<vmem>>, %arg2: memref<8x8x32xf32, #tpu.memory_space<vmem>>, %arg3: memref<2x8x32xf32, #tpu.memory_space<vmem>>, %arg4: memref<8x32x8xf32, #tpu.memory_space<vmem>>, %arg5: memref<8x1x8xf32, #tpu.memory_space<vmem>>, %arg6: memref<8x32x8xf32, #tpu.memory_space<vmem>>, %arg7: memref<8x1x8xf32, #tpu.memory_space<vmem>>, %arg8: memref<8x32x8xf32, #tpu.memory_space<vmem>>, %arg9: memref<8x1x8xf32, #tpu.memory_space<vmem>>, %arg10: memref<8x8x32xf32, #tpu.memory_space<vmem>>, %arg11: memref<1x1x32xf32, #tpu.memory_space<vmem>>, %arg12: memref<2x32x64xf32, #tpu.memory_space<vmem>>, %arg13: memref<1x1x64xf32, #tpu.memory_space<vmem>>, %arg14: memref<2x64x32xf32, #tpu.memory_space<vmem>>, %arg15: memref<1x1x32xf32, #tpu.memory_space<vmem>>, %arg16: memref<1x1x32xf32, #tpu.memory_space<vmem>>, %arg17: memref<1x1x32xf32, #tpu.memory_space<vmem>>, %arg18: memref<1x1x32xf32, #tpu.memory_space<vmem>>, %arg19: memref<1x1x32xf32, #tpu.memory_space<vmem>>, %arg20: memref<2x8x32xf32, #tpu.memory_space<vmem>>) attributes {dimension_semantics = [], scalar_prefetch = 0 : i64, scratch_operands = 0 : i64, tpu.core_type = #tpu.core_type<tc>} {
    %c0 = arith.constant 0 : index
    %c0_0 = arith.constant 0 : index
    %c0_1 = arith.constant 0 : index
    %0 = vector.load %arg0[%c0, %c0_0, %c0_1] : memref<8x8x32xf32, #tpu.memory_space<vmem>>, vector<8x8x32xf32>
    %c0_2 = arith.constant 0 : index
    %c0_3 = arith.constant 0 : index
    %c0_4 = arith.constant 0 : index
    %1 = vector.load %arg4[%c0_2, %c0_3, %c0_4] : memref<8x32x8xf32, #tpu.memory_space<vmem>>, vector<8x32x8xf32>
    "tpu.trace_start"() <{level = 10 : i32, message = "bte,bed->btd"}> : () -> ()
    %cst = arith.constant dense<0.000000e+00> : vector<8x8x8xf32>
    %2 = tpu.matmul %0, %1, %cst {dimension_numbers = #tpu.dot_dimension_numbers<[2], [1], [1], [2], [0, 0, 0, 1, 1, 2], [0], [0]>} : vector<8x8x32xf32>, vector<8x32x8xf32>, vector<8x8x8xf32> -> vector<8x8x8xf32>
    "tpu.trace_stop"() : () -> ()
    %c0_5 = arith.constant 0 : index
    %c0_6 = arith.constant 0 : index
    %c0_7 = arith.constant 0 : index
    %3 = vector.load %arg5[%c0_5, %c0_6, %c0_7] : memref<8x1x8xf32, #tpu.memory_space<vmem>>, vector<8x1x8xf32>
    %4 = vector.broadcast %3 : vector<8x1x8xf32> to vector<8x8x8xf32>
    %5 = arith.addf %2, %4 : vector<8x8x8xf32>
    %c0_8 = arith.constant 0 : index
    %c0_9 = arith.constant 0 : index
    %c0_10 = arith.constant 0 : index
    %6 = vector.load %arg1[%c0_8, %c0_9, %c0_10] : memref<8x8x32xf32, #tpu.memory_space<vmem>>, vector<8x8x32xf32>
    %c0_11 = arith.constant 0 : index
    %c0_12 = arith.constant 0 : index
    %c0_13 = arith.constant 0 : index
    %7 = vector.load %arg6[%c0_11, %c0_12, %c0_13] : memref<8x32x8xf32, #tpu.memory_space<vmem>>, vector<8x32x8xf32>
    "tpu.trace_start"() <{level = 10 : i32, message = "bse,bed->bsd"}> : () -> ()
    %cst_14 = arith.constant dense<0.000000e+00> : vector<8x8x8xf32>
    %8 = tpu.matmul %6, %7, %cst_14 {dimension_numbers = #tpu.dot_dimension_numbers<[2], [1], [1], [2], [0, 0, 0, 1, 1, 2], [0], [0]>} : vector<8x8x32xf32>, vector<8x32x8xf32>, vector<8x8x8xf32> -> vector<8x8x8xf32>
    "tpu.trace_stop"() : () -> ()
    %c0_15 = arith.constant 0 : index
    %c0_16 = arith.constant 0 : index
    %c0_17 = arith.constant 0 : index
    %9 = vector.load %arg7[%c0_15, %c0_16, %c0_17] : memref<8x1x8xf32, #tpu.memory_space<vmem>>, vector<8x1x8xf32>
    %10 = vector.broadcast %9 : vector<8x1x8xf32> to vector<8x8x8xf32>
    %11 = arith.addf %8, %10 : vector<8x8x8xf32>
    %c0_18 = arith.constant 0 : index
    %c0_19 = arith.constant 0 : index
    %c0_20 = arith.constant 0 : index
    %12 = vector.load %arg2[%c0_18, %c0_19, %c0_20] : memref<8x8x32xf32, #tpu.memory_space<vmem>>, vector<8x8x32xf32>
    %c0_21 = arith.constant 0 : index
    %c0_22 = arith.constant 0 : index
    %c0_23 = arith.constant 0 : index
    %13 = vector.load %arg8[%c0_21, %c0_22, %c0_23] : memref<8x32x8xf32, #tpu.memory_space<vmem>>, vector<8x32x8xf32>
    "tpu.trace_start"() <{level = 10 : i32, message = "bse,bed->bsd"}> : () -> ()
    %cst_24 = arith.constant dense<0.000000e+00> : vector<8x8x8xf32>
    %14 = tpu.matmul %12, %13, %cst_24 {dimension_numbers = #tpu.dot_dimension_numbers<[2], [1], [1], [2], [0, 0, 0, 1, 1, 2], [0], [0]>} : vector<8x8x32xf32>, vector<8x32x8xf32>, vector<8x8x8xf32> -> vector<8x8x8xf32>
    "tpu.trace_stop"() : () -> ()
    %c0_25 = arith.constant 0 : index
    %c0_26 = arith.constant 0 : index
    %c0_27 = arith.constant 0 : index
    %15 = vector.load %arg9[%c0_25, %c0_26, %c0_27] : memref<8x1x8xf32, #tpu.memory_space<vmem>>, vector<8x1x8xf32>
    %16 = vector.broadcast %15 : vector<8x1x8xf32> to vector<8x8x8xf32>
    %17 = arith.addf %14, %16 : vector<8x8x8xf32>
    %cst_28 = arith.constant 0.353553385 : f32
    %18 = vector.broadcast %cst_28 : f32 to vector<8x8x8xf32>
    %19 = arith.mulf %5, %18 : vector<8x8x8xf32>
    "tpu.trace_start"() <{level = 10 : i32, message = "btd,bsd->bts"}> : () -> ()
    %cst_29 = arith.constant dense<0.000000e+00> : vector<8x8x8xf32>
    %20 = tpu.matmul %19, %11, %cst_29 {dimension_numbers = #tpu.dot_dimension_numbers<[2], [2], [1], [1], [0, 0, 0, 1, 1, 1], [0], [0]>} : vector<8x8x8xf32>, vector<8x8x8xf32>, vector<8x8x8xf32> -> vector<8x8x8xf32>
    "tpu.trace_stop"() : () -> ()
    %cst_30 = arith.constant dense<0xFF800000> : vector<8x8xf32>
    %21 = vector.multi_reduction <maximumf>, %20, %cst_30 [2] : vector<8x8x8xf32> to vector<8x8xf32>
    %22 = vector.shape_cast %21 : vector<8x8xf32> to vector<8x8x1xf32>
    %23 = vector.broadcast %22 : vector<8x8x1xf32> to vector<8x8x8xf32>
    %24 = arith.subf %20, %23 : vector<8x8x8xf32>
    %25 = math.exp %24 : vector<8x8x8xf32>
    %cst_31 = arith.constant dense<0.000000e+00> : vector<8x8xf32>
    %26 = vector.multi_reduction <add>, %25, %cst_31 [2] : vector<8x8x8xf32> to vector<8x8xf32>
    %27 = vector.shape_cast %26 : vector<8x8xf32> to vector<8x8x1xf32>
    %28 = tpu.reciprocal %27 {approx = true} : vector<8x8x1xf32> -> vector<8x8x1xf32>
    %29 = vector.broadcast %28 : vector<8x8x1xf32> to vector<8x8x8xf32>
    %30 = arith.mulf %25, %29 : vector<8x8x8xf32>
    "tpu.trace_start"() <{level = 10 : i32, message = "bts,bsd->btd"}> : () -> ()
    %cst_32 = arith.constant dense<0.000000e+00> : vector<8x8x8xf32>
    %31 = tpu.matmul %30, %17, %cst_32 {dimension_numbers = #tpu.dot_dimension_numbers<[2], [1], [1], [2], [0, 0, 0, 1, 1, 2], [0], [0]>} : vector<8x8x8xf32>, vector<8x8x8xf32>, vector<8x8x8xf32> -> vector<8x8x8xf32>
    "tpu.trace_stop"() : () -> ()
    %c0_33 = arith.constant 0 : index
    %c0_34 = arith.constant 0 : index
    %c0_35 = arith.constant 0 : index
    %32 = vector.load %arg10[%c0_33, %c0_34, %c0_35] : memref<8x8x32xf32, #tpu.memory_space<vmem>>, vector<8x8x32xf32>
    "tpu.trace_start"() <{level = 10 : i32, message = "btd,bde->bte"}> : () -> ()
    %cst_36 = arith.constant dense<0.000000e+00> : vector<8x8x32xf32>
    %33 = tpu.matmul %31, %32, %cst_36 {dimension_numbers = #tpu.dot_dimension_numbers<[2], [1], [1], [2], [0, 0, 0, 1, 1, 2], [0], [0]>} : vector<8x8x8xf32>, vector<8x8x32xf32>, vector<8x8x32xf32> -> vector<8x8x32xf32>
    "tpu.trace_stop"() : () -> ()
    %34 = vector.shape_cast %33 : vector<8x8x32xf32> to vector<2x4x8x32xf32>
    %35 = vector.extract_strided_slice %34 {offsets = [0, 0, 0, 0], sizes = [2, 1, 8, 32], strides = [1, 1, 1, 1]} : vector<2x4x8x32xf32> to vector<2x1x8x32xf32>
    %36 = vector.shape_cast %35 : vector<2x1x8x32xf32> to vector<2x8x32xf32>
    %37 = vector.extract_strided_slice %34 {offsets = [0, 1, 0, 0], sizes = [2, 1, 8, 32], strides = [1, 1, 1, 1]} : vector<2x4x8x32xf32> to vector<2x1x8x32xf32>
    %38 = vector.shape_cast %37 : vector<2x1x8x32xf32> to vector<2x8x32xf32>
    %39 = arith.addf %36, %38 : vector<2x8x32xf32>
    %40 = vector.extract_strided_slice %34 {offsets = [0, 2, 0, 0], sizes = [2, 1, 8, 32], strides = [1, 1, 1, 1]} : vector<2x4x8x32xf32> to vector<2x1x8x32xf32>
    %41 = vector.shape_cast %40 : vector<2x1x8x32xf32> to vector<2x8x32xf32>
    %42 = arith.addf %39, %41 : vector<2x8x32xf32>
    %43 = vector.extract_strided_slice %34 {offsets = [0, 3, 0, 0], sizes = [2, 1, 8, 32], strides = [1, 1, 1, 1]} : vector<2x4x8x32xf32> to vector<2x1x8x32xf32>
    %44 = vector.shape_cast %43 : vector<2x1x8x32xf32> to vector<2x8x32xf32>
    %45 = arith.addf %42, %44 : vector<2x8x32xf32>
    %c0_37 = arith.constant 0 : index
    %c0_38 = arith.constant 0 : index
    %c0_39 = arith.constant 0 : index
    %46 = vector.load %arg11[%c0_37, %c0_38, %c0_39] : memref<1x1x32xf32, #tpu.memory_space<vmem>>, vector<1x1x32xf32>
    %47 = vector.broadcast %46 : vector<1x1x32xf32> to vector<2x8x32xf32>
    %48 = arith.addf %45, %47 : vector<2x8x32xf32>
    %c0_40 = arith.constant 0 : index
    %c0_41 = arith.constant 0 : index
    %c0_42 = arith.constant 0 : index
    %49 = vector.load %arg3[%c0_40, %c0_41, %c0_42] : memref<2x8x32xf32, #tpu.memory_space<vmem>>, vector<2x8x32xf32>
    %50 = arith.addf %49, %48 : vector<2x8x32xf32>
    %c0_43 = arith.constant 0 : index
    %c0_44 = arith.constant 0 : index
    %c0_45 = arith.constant 0 : index
    %51 = vector.load %arg16[%c0_43, %c0_44, %c0_45] : memref<1x1x32xf32, #tpu.memory_space<vmem>>, vector<1x1x32xf32>
    %c0_46 = arith.constant 0 : index
    %c0_47 = arith.constant 0 : index
    %c0_48 = arith.constant 0 : index
    %52 = vector.load %arg17[%c0_46, %c0_47, %c0_48] : memref<1x1x32xf32, #tpu.memory_space<vmem>>, vector<1x1x32xf32>
    %cst_49 = arith.constant dense<0.000000e+00> : vector<2x8xf32>
    %53 = vector.multi_reduction <add>, %50, %cst_49 [2] : vector<2x8x32xf32> to vector<2x8xf32>
    %54 = vector.shape_cast %53 : vector<2x8xf32> to vector<2x8x1xf32>
    %cst_50 = arith.constant 3.200000e+01 : f32
    %55 = vector.broadcast %cst_50 : f32 to vector<2x8x1xf32>
    %56 = arith.divf %54, %55 : vector<2x8x1xf32>
    %57 = vector.broadcast %56 : vector<2x8x1xf32> to vector<2x8x32xf32>
    %58 = arith.subf %50, %57 : vector<2x8x32xf32>
    %59 = arith.mulf %58, %58 : vector<2x8x32xf32>
    %cst_51 = arith.constant dense<0.000000e+00> : vector<2x8xf32>
    %60 = vector.multi_reduction <add>, %59, %cst_51 [2] : vector<2x8x32xf32> to vector<2x8xf32>
    %61 = vector.shape_cast %60 : vector<2x8xf32> to vector<2x8x1xf32>
    %cst_52 = arith.constant 3.200000e+01 : f32
    %62 = vector.broadcast %cst_52 : f32 to vector<2x8x1xf32>
    %63 = arith.divf %61, %62 : vector<2x8x1xf32>
    %cst_53 = arith.constant 9.99999974E-6 : f32
    %64 = vector.broadcast %cst_53 : f32 to vector<2x8x1xf32>
    %65 = arith.addf %63, %64 : vector<2x8x1xf32>
    %66 = math.rsqrt %65 : vector<2x8x1xf32>
    %67 = vector.broadcast %66 : vector<2x8x1xf32> to vector<2x8x32xf32>
    %68 = arith.mulf %58, %67 : vector<2x8x32xf32>
    %69 = vector.broadcast %51 : vector<1x1x32xf32> to vector<2x8x32xf32>
    %70 = arith.mulf %68, %69 : vector<2x8x32xf32>
    %71 = vector.broadcast %52 : vector<1x1x32xf32> to vector<2x8x32xf32>
    %72 = arith.addf %70, %71 : vector<2x8x32xf32>
    %c0_54 = arith.constant 0 : index
    %c0_55 = arith.constant 0 : index
    %c0_56 = arith.constant 0 : index
    %73 = vector.load %arg12[%c0_54, %c0_55, %c0_56] : memref<2x32x64xf32, #tpu.memory_space<vmem>>, vector<2x32x64xf32>
    "tpu.trace_start"() <{level = 10 : i32, message = "nte,nef->ntf"}> : () -> ()
    %cst_57 = arith.constant dense<0.000000e+00> : vector<2x8x64xf32>
    %74 = tpu.matmul %72, %73, %cst_57 {dimension_numbers = #tpu.dot_dimension_numbers<[2], [1], [1], [2], [0, 0, 0, 1, 1, 2], [0], [0]>} : vector<2x8x32xf32>, vector<2x32x64xf32>, vector<2x8x64xf32> -> vector<2x8x64xf32>
    "tpu.trace_stop"() : () -> ()
    %c0_58 = arith.constant 0 : index
    %c0_59 = arith.constant 0 : index
    %c0_60 = arith.constant 0 : index
    %75 = vector.load %arg13[%c0_58, %c0_59, %c0_60] : memref<1x1x64xf32, #tpu.memory_space<vmem>>, vector<1x1x64xf32>
    %76 = vector.broadcast %75 : vector<1x1x64xf32> to vector<2x8x64xf32>
    %77 = arith.addf %74, %76 : vector<2x8x64xf32>
    %cst_61 = arith.constant 0.000000e+00 : f32
    %78 = vector.broadcast %cst_61 : f32 to vector<2x8x64xf32>
    %79 = arith.maximumf %77, %78 : vector<2x8x64xf32>
    %c0_62 = arith.constant 0 : index
    %c0_63 = arith.constant 0 : index
    %c0_64 = arith.constant 0 : index
    %80 = vector.load %arg14[%c0_62, %c0_63, %c0_64] : memref<2x64x32xf32, #tpu.memory_space<vmem>>, vector<2x64x32xf32>
    "tpu.trace_start"() <{level = 10 : i32, message = "ntf,nfe->nte"}> : () -> ()
    %cst_65 = arith.constant dense<0.000000e+00> : vector<2x8x32xf32>
    %81 = tpu.matmul %79, %80, %cst_65 {dimension_numbers = #tpu.dot_dimension_numbers<[2], [1], [1], [2], [0, 0, 0, 1, 1, 2], [0], [0]>} : vector<2x8x64xf32>, vector<2x64x32xf32>, vector<2x8x32xf32> -> vector<2x8x32xf32>
    "tpu.trace_stop"() : () -> ()
    %c0_66 = arith.constant 0 : index
    %c0_67 = arith.constant 0 : index
    %c0_68 = arith.constant 0 : index
    %82 = vector.load %arg15[%c0_66, %c0_67, %c0_68] : memref<1x1x32xf32, #tpu.memory_space<vmem>>, vector<1x1x32xf32>
    %83 = vector.broadcast %82 : vector<1x1x32xf32> to vector<2x8x32xf32>
    %84 = arith.addf %81, %83 : vector<2x8x32xf32>
    %85 = arith.addf %72, %84 : vector<2x8x32xf32>
    %c0_69 = arith.constant 0 : index
    %c0_70 = arith.constant 0 : index
    %c0_71 = arith.constant 0 : index
    %86 = vector.load %arg18[%c0_69, %c0_70, %c0_71] : memref<1x1x32xf32, #tpu.memory_space<vmem>>, vector<1x1x32xf32>
    %c0_72 = arith.constant 0 : index
    %c0_73 = arith.constant 0 : index
    %c0_74 = arith.constant 0 : index
    %87 = vector.load %arg19[%c0_72, %c0_73, %c0_74] : memref<1x1x32xf32, #tpu.memory_space<vmem>>, vector<1x1x32xf32>
    %cst_75 = arith.constant dense<0.000000e+00> : vector<2x8xf32>
    %88 = vector.multi_reduction <add>, %85, %cst_75 [2] : vector<2x8x32xf32> to vector<2x8xf32>
    %89 = vector.shape_cast %88 : vector<2x8xf32> to vector<2x8x1xf32>
    %cst_76 = arith.constant 3.200000e+01 : f32
    %90 = vector.broadcast %cst_76 : f32 to vector<2x8x1xf32>
    %91 = arith.divf %89, %90 : vector<2x8x1xf32>
    %92 = vector.broadcast %91 : vector<2x8x1xf32> to vector<2x8x32xf32>
    %93 = arith.subf %85, %92 : vector<2x8x32xf32>
    %94 = arith.mulf %93, %93 : vector<2x8x32xf32>
    %cst_77 = arith.constant dense<0.000000e+00> : vector<2x8xf32>
    %95 = vector.multi_reduction <add>, %94, %cst_77 [2] : vector<2x8x32xf32> to vector<2x8xf32>
    %96 = vector.shape_cast %95 : vector<2x8xf32> to vector<2x8x1xf32>
    %cst_78 = arith.constant 3.200000e+01 : f32
    %97 = vector.broadcast %cst_78 : f32 to vector<2x8x1xf32>
    %98 = arith.divf %96, %97 : vector<2x8x1xf32>
    %cst_79 = arith.constant 9.99999974E-6 : f32
    %99 = vector.broadcast %cst_79 : f32 to vector<2x8x1xf32>
    %100 = arith.addf %98, %99 : vector<2x8x1xf32>
    %101 = math.rsqrt %100 : vector<2x8x1xf32>
    %102 = vector.broadcast %101 : vector<2x8x1xf32> to vector<2x8x32xf32>
    %103 = arith.mulf %93, %102 : vector<2x8x32xf32>
    %104 = vector.broadcast %86 : vector<1x1x32xf32> to vector<2x8x32xf32>
    %105 = arith.mulf %103, %104 : vector<2x8x32xf32>
    %106 = vector.broadcast %87 : vector<1x1x32xf32> to vector<2x8x32xf32>
    %107 = arith.addf %105, %106 : vector<2x8x32xf32>
    %c0_80 = arith.constant 0 : index
    %c0_81 = arith.constant 0 : index
    %c0_82 = arith.constant 0 : index
    %108 = vector.load %arg20[%c0_80, %c0_81, %c0_82] : memref<2x8x32xf32, #tpu.memory_space<vmem>>, vector<2x8x32xf32>
    tpu.vector_store %arg20[%c0_80, %c0_81, %c0_82], %107 {strides = array<i32>} : memref<2x8x32xf32, #tpu.memory_space<vmem>>, vector<2x8x32xf32>,
    return
  }
}

</mosaic_0001>

<llo_original>
// kernel: transformer_decoder_layer.1
$region0: #{transformer_decoder_layer.1}
  #allocation0 [shape = 'u32[]', space=smem, size = 0x4, offset = 0x4, fixed_abs, tag = 'smem constant byte address 0x4 - core index']
  #allocation1 [shape = 'u32[72,128]{1,0:T(1,128)}', space=vmem, size = 0x9000, scoped, tag = 'internal scratch']
  %s0 = inlined_call_operand.vmem [shape: f32[8,8,32], index: 0, kind: input, shape index: {}]
  %s1 = inlined_call_operand.vmem [shape: f32[8,8,32], index: 1, kind: input, shape index: {}]
  %s2 = inlined_call_operand.vmem [shape: f32[8,8,32], index: 2, kind: input, shape index: {}]
  %s3 = inlined_call_operand.vmem [shape: f32[2,8,32], index: 3, kind: input, shape index: {}]
  %s4 = inlined_call_operand.vmem [shape: f32[8,32,8], index: 4, kind: input, shape index: {}]
  %s5 = inlined_call_operand.vmem [shape: f32[8,1,8], index: 5, kind: input, shape index: {}]
  %s6 = inlined_call_operand.vmem [shape: f32[8,32,8], index: 6, kind: input, shape index: {}]
  %s7 = inlined_call_operand.vmem [shape: f32[8,1,8], index: 7, kind: input, shape index: {}]
  %s8 = inlined_call_operand.vmem [shape: f32[8,32,8], index: 8, kind: input, shape index: {}]
  %s9 = inlined_call_operand.vmem [shape: f32[8,1,8], index: 9, kind: input, shape index: {}]
  %s10 = inlined_call_operand.vmem [shape: f32[8,8,32], index: 10, kind: input, shape index: {}]
  %s11 = inlined_call_operand.vmem [shape: f32[1,1,32], index: 11, kind: input, shape index: {}]
  %s12 = inlined_call_operand.vmem [shape: f32[2,32,64], index: 12, kind: input, shape index: {}]
  %s13 = inlined_call_operand.vmem [shape: f32[1,1,64], index: 13, kind: input, shape index: {}]
  %s14 = inlined_call_operand.vmem [shape: f32[2,64,32], index: 14, kind: input, shape index: {}]
  %s15 = inlined_call_operand.vmem [shape: f32[1,1,32], index: 15, kind: input, shape index: {}]
  %s16 = inlined_call_operand.vmem [shape: f32[1,1,32], index: 16, kind: input, shape index: {}]
  %s17 = inlined_call_operand.vmem [shape: f32[1,1,32], index: 17, kind: input, shape index: {}]
  %s18 = inlined_call_operand.vmem [shape: f32[1,1,32], index: 18, kind: input, shape index: {}]
  %s19 = inlined_call_operand.vmem [shape: f32[1,1,32], index: 19, kind: input, shape index: {}]
  %s20 = inlined_call_operand.vmem [shape: f32[2,8,32], index: 20, kind: output, shape index: {}]
  %s21 = sld [smem:[#allocation0]]
  $region90: #{transformer_decoder_layer.1} parent=0
    _
  %s23 = ssub.s32 1, %s21
  %s24 = scalar_select 0, %s23, %s21
  // Predicated region
  $region2: #{transformer_decoder_layer.1} parent=0 // pred_check
    _
  $region3: #{transformer_decoder_layer.1} parent=0 // pred_check_branch
    %26 = sbr.rel (0) target = $region5
  $region4: #{transformer_decoder_layer.1} parent=0 // pred_region
    _
  $region5: #{transformer_decoder_layer.1} parent=0 // pred_fallthru
    _
  // Predicated region
  $region6: #{transformer_decoder_layer.1} parent=0 // pred_check
    _
  $region7: #{transformer_decoder_layer.1} parent=0 // pred_check_branch
    %28 = sbr.rel (0) target = $region9
  $region8: #{transformer_decoder_layer.1} parent=0 // pred_region
    _
  $region9: #{transformer_decoder_layer.1} parent=0 // pred_fallthru
    _
  // Predicated region
  $region10: #{transformer_decoder_layer.1} parent=0 // pred_check
    _
  $region11: #{transformer_decoder_layer.1} parent=0 // pred_check_branch
    %30 = sbr.rel (0) target = $region13
  $region12: #{transformer_decoder_layer.1} parent=0 // pred_region
    _
  $region13: #{transformer_decoder_layer.1} parent=0 // pred_fallthru
    _
  // Predicated region
  $region14: #{transformer_decoder_layer.1} parent=0 // pred_check
    _
  $region15: #{transformer_decoder_layer.1} parent=0 // pred_check_branch
    %32 = sbr.rel (0) target = $region17
  $region16: #{transformer_decoder_layer.1} parent=0 // pred_region
    _
  $region17: #{transformer_decoder_layer.1} parent=0 // pred_fallthru
    _
  // Predicated region
  $region18: #{transformer_decoder_layer.1} parent=0 // pred_check
    _
  $region19: #{transformer_decoder_layer.1} parent=0 // pred_check_branch
    %34 = sbr.rel (0) target = $region21
  $region20: #{transformer_decoder_layer.1} parent=0 // pred_region
    _
  $region21: #{transformer_decoder_layer.1} parent=0 // pred_fallthru
    _
  // Predicated region
  $region22: #{transformer_decoder_layer.1} parent=0 // pred_check
    _
  $region23: #{transformer_decoder_layer.1} parent=0 // pred_check_branch
    %36 = sbr.rel (0) target = $region25
  $region24: #{transformer_decoder_layer.1} parent=0 // pred_region
    _
  $region25: #{transformer_decoder_layer.1} parent=0 // pred_fallthru
    _
  // Predicated region
  $region26: #{transformer_decoder_layer.1} parent=0 // pred_check
    _
  $region27: #{transformer_decoder_layer.1} parent=0 // pred_check_branch
    %38 = sbr.rel (0) target = $region29
  $region28: #{transformer_decoder_layer.1} parent=0 // pred_region
    _
  $region29: #{transformer_decoder_layer.1} parent=0 // pred_fallthru
    _
  // Predicated region
  $region30: #{transformer_decoder_layer.1} parent=0 // pred_check
    _
  $region31: #{transformer_decoder_layer.1} parent=0 // pred_check_branch
    %40 = sbr.rel (0) target = $region33
  $region32: #{transformer_decoder_layer.1} parent=0 // pred_region
    _
  $region33: #{transformer_decoder_layer.1} parent=0 // pred_fallthru
    _
  // Predicated region
  $region34: #{transformer_decoder_layer.1} parent=0 // pred_check
    _
  $region35: #{transformer_decoder_layer.1} parent=0 // pred_check_branch
    %42 = sbr.rel (0) target = $region37
  $region36: #{transformer_decoder_layer.1} parent=0 // pred_region
    _
  $region37: #{transformer_decoder_layer.1} parent=0 // pred_fallthru
    _
  // Predicated region
  $region38: #{transformer_decoder_layer.1} parent=0 // pred_check
    _
  $region39: #{transformer_decoder_layer.1} parent=0 // pred_check_branch
    %44 = sbr.rel (0) target = $region41
  $region40: #{transformer_decoder_layer.1} parent=0 // pred_region
    _
  $region41: #{transformer_decoder_layer.1} parent=0 // pred_fallthru
    _
  // Predicated region
  $region42: #{transformer_decoder_layer.1} parent=0 // pred_check
    _
  $region43: #{transformer_decoder_layer.1} parent=0 // pred_check_branch
    %46 = sbr.rel (0) target = $region45
  $region44: #{transformer_decoder_layer.1} parent=0 // pred_region
    _
  $region45: #{transformer_decoder_layer.1} parent=0 // pred_fallthru
    _
  // Predicated region
  $region46: #{transformer_decoder_layer.1} parent=0 // pred_check
    _
  $region47: #{transformer_decoder_layer.1} parent=0 // pred_check_branch
    %48 = sbr.rel (0) target = $region49
  $region48: #{transformer_decoder_layer.1} parent=0 // pred_region
    _
  $region49: #{transformer_decoder_layer.1} parent=0 // pred_fallthru
    _
  // Predicated region
  $region50: #{transformer_decoder_layer.1} parent=0 // pred_check
    _
  $region51: #{transformer_decoder_layer.1} parent=0 // pred_check_branch
    %50 = sbr.rel (0) target = $region53
  $region52: #{transformer_decoder_layer.1} parent=0 // pred_region
    _
  $region53: #{transformer_decoder_layer.1} parent=0 // pred_fallthru
    _
  // Predicated region
  $region54: #{transformer_decoder_layer.1} parent=0 // pred_check
    _
  $region55: #{transformer_decoder_layer.1} parent=0 // pred_check_branch
    %52 = sbr.rel (0) target = $region57
  $region56: #{transformer_decoder_layer.1} parent=0 // pred_region
    _
  $region57: #{transformer_decoder_layer.1} parent=0 // pred_fallthru
    _
  // Predicated region
  $region58: #{transformer_decoder_layer.1} parent=0 // pred_check
    _
  $region59: #{transformer_decoder_layer.1} parent=0 // pred_check_branch
    %54 = sbr.rel (0) target = $region61
  $region60: #{transformer_decoder_layer.1} parent=0 // pred_region
    _
  $region61: #{transformer_decoder_layer.1} parent=0 // pred_fallthru
    _
  // Predicated region
  $region62: #{transformer_decoder_layer.1} parent=0 // pred_check
    _
  $region63: #{transformer_decoder_layer.1} parent=0 // pred_check_branch
    %56 = sbr.rel (0) target = $region65
  $region64: #{transformer_decoder_layer.1} parent=0 // pred_region
    _
  $region65: #{transformer_decoder_layer.1} parent=0 // pred_fallthru
    _
  // Predicated region
  $region66: #{transformer_decoder_layer.1} parent=0 // pred_check
    _
  $region67: #{transformer_decoder_layer.1} parent=0 // pred_check_branch
    %58 = sbr.rel (0) target = $region69
  $region68: #{transformer_decoder_layer.1} parent=0 // pred_region
    _
  $region69: #{transformer_decoder_layer.1} parent=0 // pred_fallthru
    _
  // Predicated region
  $region70: #{transformer_decoder_layer.1} parent=0 // pred_check
    _
  $region71: #{transformer_decoder_layer.1} parent=0 // pred_check_branch
    %60 = sbr.rel (0) target = $region73
  $region72: #{transformer_decoder_layer.1} parent=0 // pred_region
    _
  $region73: #{transformer_decoder_layer.1} parent=0 // pred_fallthru
    _
  // Predicated region
  $region74: #{transformer_decoder_layer.1} parent=0 // pred_check
    _
  $region75: #{transformer_decoder_layer.1} parent=0 // pred_check_branch
    %62 = sbr.rel (0) target = $region77
  $region76: #{transformer_decoder_layer.1} parent=0 // pred_region
    _
  $region77: #{transformer_decoder_layer.1} parent=0 // pred_fallthru
    _
  // Predicated region
  $region78: #{transformer_decoder_layer.1} parent=0 // pred_check
    _
  $region79: #{transformer_decoder_layer.1} parent=0 // pred_check_branch
    %64 = sbr.rel (0) target = $region81
  $region80: #{transformer_decoder_layer.1} parent=0 // pred_region
    _
  $region81: #{transformer_decoder_layer.1} parent=0 // pred_fallthru
    _
  %v65 = vld [vmem:[%s0] sm:$0xff]
  %v66 = vld [vmem:[%s0 + $0x8] sm:$0xff]
  %v67 = vld [vmem:[%s0 + $0x10] sm:$0xff]
  %v68 = vld [vmem:[%s0 + $0x18] sm:$0xff]
  %v69 = vld [vmem:[%s0 + $0x20] sm:$0xff]
  %v70 = vld [vmem:[%s0 + $0x28] sm:$0xff]
  %v71 = vld [vmem:[%s0 + $0x30] sm:$0xff]
  %v72 = vld [vmem:[%s0 + $0x38] sm:$0xff]
  %v73 = vld [vmem:[%s4] sm:$0xff]
  %v74 = vld [vmem:[%s4 + $0x8] sm:$0xff]
  %v75 = vld [vmem:[%s4 + $0x10] sm:$0xff]
  %v76 = vld [vmem:[%s4 + $0x18] sm:$0xff]
  %v77 = vld [vmem:[%s4 + $0x20] sm:$0xff]
  %v78 = vld [vmem:[%s4 + $0x28] sm:$0xff]
  %v79 = vld [vmem:[%s4 + $0x30] sm:$0xff]
  %v80 = vld [vmem:[%s4 + $0x38] sm:$0xff]
  %v81 = vld [vmem:[%s4 + $0x40] sm:$0xff]
  %v82 = vld [vmem:[%s4 + $0x48] sm:$0xff]
  %v83 = vld [vmem:[%s4 + $0x50] sm:$0xff]
  %v84 = vld [vmem:[%s4 + $0x58] sm:$0xff]
  %v85 = vld [vmem:[%s4 + $0x60] sm:$0xff]
  %v86 = vld [vmem:[%s4 + $0x68] sm:$0xff]
  %v87 = vld [vmem:[%s4 + $0x70] sm:$0xff]
  %v88 = vld [vmem:[%s4 + $0x78] sm:$0xff]
  %v89 = vld [vmem:[%s4 + $0x80] sm:$0xff]
  %v90 = vld [vmem:[%s4 + $0x88] sm:$0xff]
  %v91 = vld [vmem:[%s4 + $0x90] sm:$0xff]
  %v92 = vld [vmem:[%s4 + $0x98] sm:$0xff]
  %v93 = vld [vmem:[%s4 + $0xa0] sm:$0xff]
  %v94 = vld [vmem:[%s4 + $0xa8] sm:$0xff]
  %v95 = vld [vmem:[%s4 + $0xb0] sm:$0xff]
  %v96 = vld [vmem:[%s4 + $0xb8] sm:$0xff]
  %v97 = vld [vmem:[%s4 + $0xc0] sm:$0xff]
  %v98 = vld [vmem:[%s4 + $0xc8] sm:$0xff]
  %v99 = vld [vmem:[%s4 + $0xd0] sm:$0xff]
  %v100 = vld [vmem:[%s4 + $0xd8] sm:$0xff]
  %v101 = vld [vmem:[%s4 + $0xe0] sm:$0xff]
  %v102 = vld [vmem:[%s4 + $0xe8] sm:$0xff]
  %v103 = vld [vmem:[%s4 + $0xf0] sm:$0xff]
  %v104 = vld [vmem:[%s4 + $0xf8] sm:$0xff]
  %v105 = vld [vmem:[%s5] sm:$0x1]
  %v106 = vld [vmem:[%s5 + $0x1] sm:$0x1]
  %v107 = vld [vmem:[%s5 + $0x2] sm:$0x1]
  %v108 = vld [vmem:[%s5 + $0x3] sm:$0x1]
  %v109 = vld [vmem:[%s5 + $0x4] sm:$0x1]
  %v110 = vld [vmem:[%s5 + $0x5] sm:$0x1]
  %v111 = vld [vmem:[%s5 + $0x6] sm:$0x1]
  %v112 = vld [vmem:[%s5 + $0x7] sm:$0x1]
  %v121 = vperm.slane %v105, 0
  %v122 = vperm.slane %v106, 0
  %v123 = vperm.slane %v107, 0
  %v124 = vperm.slane %v108, 0
  %v125 = vperm.slane %v109, 0
  %v126 = vperm.slane %v110, 0
  %v127 = vperm.slane %v111, 0
  %v128 = vperm.slane %v112, 0
  %vm137 = vcmask 261120
  %v139 = vsel %vm137, %v65, 0
  %141 = vmatpush.msra.mxu0 0.0
  %142 = vmatpush.msra.mxu0 0.0
  %143 = vmatpush.msra.mxu0 0.0
  %144 = vmatpush.msra.mxu0 0.0
  %145 = vmatpush.msra.mxu0 0.0
  %146 = vmatpush.msra.mxu0 0.0
  %147 = vmatpush.msra.mxu0 0.0
  %148 = vmatpush.msra.mxu0 0.0
  %149 = vmatpush.msra.mxu0 0.0
  %150 = vmatpush.msra.mxu0 0.0
  %151 = vmatpush.msra.mxu0 0.0
  %152 = vmatpush.msra.mxu0 0.0
  %153 = vmatpush.msra.mxu0 %v76
  %154 = vmatpush.msra.mxu0 %v75
  %155 = vmatpush.msra.mxu0 %v74
  %156 = vmatpush.msra.mxu0 %v73
  %157 = vmatmul.f32.gmra.mxu0 %v139
  %v158 = vpop.f32.mrf.mxu0
  %v159 = vadd.f32 %v121, %v158
  %160 = vdwg.mxu0
  %v162 = vsel %vm137, %v66, 0
  %164 = vmatpush.msra.mxu0 0.0
  %165 = vmatpush.msra.mxu0 0.0
  %166 = vmatpush.msra.mxu0 0.0
  %167 = vmatpush.msra.mxu0 0.0
  %168 = vmatpush.msra.mxu0 0.0
  %169 = vmatpush.msra.mxu0 0.0
  %170 = vmatpush.msra.mxu0 0.0
  %171 = vmatpush.msra.mxu0 0.0
  %172 = vmatpush.msra.mxu0 0.0
  %173 = vmatpush.msra.mxu0 0.0
  %174 = vmatpush.msra.mxu0 0.0
  %175 = vmatpush.msra.mxu0 0.0
  %176 = vmatpush.msra.mxu0 %v80
  %177 = vmatpush.msra.mxu0 %v79
  %178 = vmatpush.msra.mxu0 %v78
  %179 = vmatpush.msra.mxu0 %v77
  %180 = vmatmul.f32.gmra.mxu0 %v162
  %v181 = vpop.f32.mrf.mxu0
  %v182 = vadd.f32 %v122, %v181
  %183 = vdwg.mxu0
  %v185 = vsel %vm137, %v67, 0
  %187 = vmatpush.msra.mxu0 0.0
  %188 = vmatpush.msra.mxu0 0.0
  %189 = vmatpush.msra.mxu0 0.0
  %190 = vmatpush.msra.mxu0 0.0
  %191 = vmatpush.msra.mxu0 0.0
  %192 = vmatpush.msra.mxu0 0.0
  %193 = vmatpush.msra.mxu0 0.0
  %194 = vmatpush.msra.mxu0 0.0
  %195 = vmatpush.msra.mxu0 0.0
  %196 = vmatpush.msra.mxu0 0.0
  %197 = vmatpush.msra.mxu0 0.0
  %198 = vmatpush.msra.mxu0 0.0
  %199 = vmatpush.msra.mxu0 %v84
  %200 = vmatpush.msra.mxu0 %v83
  %201 = vmatpush.msra.mxu0 %v82
  %202 = vmatpush.msra.mxu0 %v81
  %203 = vmatmul.f32.gmra.mxu0 %v185
  %v204 = vpop.f32.mrf.mxu0
  %v205 = vadd.f32 %v123, %v204
  %206 = vdwg.mxu0
  %v208 = vsel %vm137, %v68, 0
  %210 = vmatpush.msra.mxu0 0.0
  %211 = vmatpush.msra.mxu0 0.0
  %212 = vmatpush.msra.mxu0 0.0
  %213 = vmatpush.msra.mxu0 0.0
  %214 = vmatpush.msra.mxu0 0.0
  %215 = vmatpush.msra.mxu0 0.0
  %216 = vmatpush.msra.mxu0 0.0
  %217 = vmatpush.msra.mxu0 0.0
  %218 = vmatpush.msra.mxu0 0.0
  %219 = vmatpush.msra.mxu0 0.0
  %220 = vmatpush.msra.mxu0 0.0
  %221 = vmatpush.msra.mxu0 0.0
  %222 = vmatpush.msra.mxu0 %v88
  %223 = vmatpush.msra.mxu0 %v87
  %224 = vmatpush.msra.mxu0 %v86
  %225 = vmatpush.msra.mxu0 %v85
  %226 = vmatmul.f32.gmra.mxu0 %v208
  %v227 = vpop.f32.mrf.mxu0
  %v228 = vadd.f32 %v124, %v227
  %229 = vdwg.mxu0
  %v231 = vsel %vm137, %v69, 0
  %233 = vmatpush.msra.mxu0 0.0
  %234 = vmatpush.msra.mxu0 0.0
  %235 = vmatpush.msra.mxu0 0.0
  %236 = vmatpush.msra.mxu0 0.0
  %237 = vmatpush.msra.mxu0 0.0
  %238 = vmatpush.msra.mxu0 0.0
  %239 = vmatpush.msra.mxu0 0.0
  %240 = vmatpush.msra.mxu0 0.0
  %241 = vmatpush.msra.mxu0 0.0
  %242 = vmatpush.msra.mxu0 0.0
  %243 = vmatpush.msra.mxu0 0.0
  %244 = vmatpush.msra.mxu0 0.0
  %245 = vmatpush.msra.mxu0 %v92
  %246 = vmatpush.msra.mxu0 %v91
  %247 = vmatpush.msra.mxu0 %v90
  %248 = vmatpush.msra.mxu0 %v89
  %249 = vmatmul.f32.gmra.mxu0 %v231
  %v250 = vpop.f32.mrf.mxu0
  %v251 = vadd.f32 %v125, %v250
  %252 = vdwg.mxu0
  %v254 = vsel %vm137, %v70, 0
  %256 = vmatpush.msra.mxu0 0.0
  %257 = vmatpush.msra.mxu0 0.0
  %258 = vmatpush.msra.mxu0 0.0
  %259 = vmatpush.msra.mxu0 0.0
  %260 = vmatpush.msra.mxu0 0.0
  %261 = vmatpush.msra.mxu0 0.0
  %262 = vmatpush.msra.mxu0 0.0
  %263 = vmatpush.msra.mxu0 0.0
  %264 = vmatpush.msra.mxu0 0.0
  %265 = vmatpush.msra.mxu0 0.0
  %266 = vmatpush.msra.mxu0 0.0
  %267 = vmatpush.msra.mxu0 0.0
  %268 = vmatpush.msra.mxu0 %v96
  %269 = vmatpush.msra.mxu0 %v95
  %270 = vmatpush.msra.mxu0 %v94
  %271 = vmatpush.msra.mxu0 %v93
  %272 = vmatmul.f32.gmra.mxu0 %v254
  %v273 = vpop.f32.mrf.mxu0
  %v274 = vadd.f32 %v126, %v273
  %275 = vdwg.mxu0
  %v277 = vsel %vm137, %v71, 0
  %279 = vmatpush.msra.mxu0 0.0
  %280 = vmatpush.msra.mxu0 0.0
  %281 = vmatpush.msra.mxu0 0.0
  %282 = vmatpush.msra.mxu0 0.0
  %283 = vmatpush.msra.mxu0 0.0
  %284 = vmatpush.msra.mxu0 0.0
  %285 = vmatpush.msra.mxu0 0.0
  %286 = vmatpush.msra.mxu0 0.0
  %287 = vmatpush.msra.mxu0 0.0
  %288 = vmatpush.msra.mxu0 0.0
  %289 = vmatpush.msra.mxu0 0.0
  %290 = vmatpush.msra.mxu0 0.0
  %291 = vmatpush.msra.mxu0 %v100
  %292 = vmatpush.msra.mxu0 %v99
  %293 = vmatpush.msra.mxu0 %v98
  %294 = vmatpush.msra.mxu0 %v97
  %295 = vmatmul.f32.gmra.mxu0 %v277
  %v296 = vpop.f32.mrf.mxu0
  %v297 = vadd.f32 %v127, %v296
  %298 = vdwg.mxu0
  %v300 = vsel %vm137, %v72, 0
  %302 = vmatpush.msra.mxu0 0.0
  %303 = vmatpush.msra.mxu0 0.0
  %304 = vmatpush.msra.mxu0 0.0
  %305 = vmatpush.msra.mxu0 0.0
  %306 = vmatpush.msra.mxu0 0.0
  %307 = vmatpush.msra.mxu0 0.0
  %308 = vmatpush.msra.mxu0 0.0
  %309 = vmatpush.msra.mxu0 0.0
  %310 = vmatpush.msra.mxu0 0.0
  %311 = vmatpush.msra.mxu0 0.0
  %312 = vmatpush.msra.mxu0 0.0
  %313 = vmatpush.msra.mxu0 0.0
  %314 = vmatpush.msra.mxu0 %v104
  %315 = vmatpush.msra.mxu0 %v103
  %316 = vmatpush.msra.mxu0 %v102
  %317 = vmatpush.msra.mxu0 %v101
  %318 = vmatmul.f32.gmra.mxu0 %v300
  %v319 = vpop.f32.mrf.mxu0
  %v320 = vadd.f32 %v128, %v319
  %321 = vdwg.mxu0
  %v322 = vld [vmem:[%s1] sm:$0xff]
  %v323 = vld [vmem:[%s1 + $0x8] sm:$0xff]
  %v324 = vld [vmem:[%s1 + $0x10] sm:$0xff]
  %v325 = vld [vmem:[%s1 + $0x18] sm:$0xff]
  %v326 = vld [vmem:[%s1 + $0x20] sm:$0xff]
  %v327 = vld [vmem:[%s1 + $0x28] sm:$0xff]
  %v328 = vld [vmem:[%s1 + $0x30] sm:$0xff]
  %v329 = vld [vmem:[%s1 + $0x38] sm:$0xff]
  %v330 = vld [vmem:[%s6] sm:$0xff]
  %v331 = vld [vmem:[%s6 + $0x8] sm:$0xff]
  %v332 = vld [vmem:[%s6 + $0x10] sm:$0xff]
  %v333 = vld [vmem:[%s6 + $0x18] sm:$0xff]
  %v334 = vld [vmem:[%s6 + $0x20] sm:$0xff]
  %v335 = vld [vmem:[%s6 + $0x28] sm:$0xff]
  %v336 = vld [vmem:[%s6 + $0x30] sm:$0xff]
  %v337 = vld [vmem:[%s6 + $0x38] sm:$0xff]
  %v338 = vld [vmem:[%s6 + $0x40] sm:$0xff]
  %v339 = vld [vmem:[%s6 + $0x48] sm:$0xff]
  %v340 = vld [vmem:[%s6 + $0x50] sm:$0xff]
  %v341 = vld [vmem:[%s6 + $0x58] sm:$0xff]
  %v342 = vld [vmem:[%s6 + $0x60] sm:$0xff]
  %v343 = vld [vmem:[%s6 + $0x68] sm:$0xff]
  %v344 = vld [vmem:[%s6 + $0x70] sm:$0xff]
  %v345 = vld [vmem:[%s6 + $0x78] sm:$0xff]
  %v346 = vld [vmem:[%s6 + $0x80] sm:$0xff]
  %v347 = vld [vmem:[%s6 + $0x88] sm:$0xff]
  %v348 = vld [vmem:[%s6 + $0x90] sm:$0xff]
  %v349 = vld [vmem:[%s6 + $0x98] sm:$0xff]
  %v350 = vld [vmem:[%s6 + $0xa0] sm:$0xff]
  %v351 = vld [vmem:[%s6 + $0xa8] sm:$0xff]
  %v352 = vld [vmem:[%s6 + $0xb0] sm:$0xff]
  %v353 = vld [vmem:[%s6 + $0xb8] sm:$0xff]
  %v354 = vld [vmem:[%s6 + $0xc0] sm:$0xff]
  %v355 = vld [vmem:[%s6 + $0xc8] sm:$0xff]
  %v356 = vld [vmem:[%s6 + $0xd0] sm:$0xff]
  %v357 = vld [vmem:[%s6 + $0xd8] sm:$0xff]
  %v358 = vld [vmem:[%s6 + $0xe0] sm:$0xff]
  %v359 = vld [vmem:[%s6 + $0xe8] sm:$0xff]
  %v360 = vld [vmem:[%s6 + $0xf0] sm:$0xff]
  %v361 = vld [vmem:[%s6 + $0xf8] sm:$0xff]
  %v362 = vld [vmem:[%s7] sm:$0x1]
  %v363 = vld [vmem:[%s7 + $0x1] sm:$0x1]
  %v364 = vld [vmem:[%s7 + $0x2] sm:$0x1]
  %v365 = vld [vmem:[%s7 + $0x3] sm:$0x1]
  %v366 = vld [vmem:[%s7 + $0x4] sm:$0x1]
  %v367 = vld [vmem:[%s7 + $0x5] sm:$0x1]
  %v368 = vld [vmem:[%s7 + $0x6] sm:$0x1]
  %v369 = vld [vmem:[%s7 + $0x7] sm:$0x1]
  %v378 = vperm.slane %v362, 0
  %v379 = vperm.slane %v363, 0
  %v380 = vperm.slane %v364, 0
  %v381 = vperm.slane %v365, 0
  %v382 = vperm.slane %v366, 0
  %v383 = vperm.slane %v367, 0
  %v384 = vperm.slane %v368, 0
  %v385 = vperm.slane %v369, 0
  %v395 = vsel %vm137, %v322, 0
  %397 = vmatpush.msra.mxu0 0.0
  %398 = vmatpush.msra.mxu0 0.0
  %399 = vmatpush.msra.mxu0 0.0
  %400 = vmatpush.msra.mxu0 0.0
  %401 = vmatpush.msra.mxu0 0.0
  %402 = vmatpush.msra.mxu0 0.0
  %403 = vmatpush.msra.mxu0 0.0
  %404 = vmatpush.msra.mxu0 0.0
  %405 = vmatpush.msra.mxu0 0.0
  %406 = vmatpush.msra.mxu0 0.0
  %407 = vmatpush.msra.mxu0 0.0
  %408 = vmatpush.msra.mxu0 0.0
  %409 = vmatpush.msra.mxu0 %v333
  %410 = vmatpush.msra.mxu0 %v332
  %411 = vmatpush.msra.mxu0 %v331
  %412 = vmatpush.msra.mxu0 %v330
  %413 = vmatmul.f32.gmra.mxu0 %v395
  %v414 = vpop.f32.mrf.mxu0
  %v415 = vadd.f32 %v378, %v414
  %416 = vdwg.mxu0
  %v418 = vsel %vm137, %v323, 0
  %420 = vmatpush.msra.mxu0 0.0
  %421 = vmatpush.msra.mxu0 0.0
  %422 = vmatpush.msra.mxu0 0.0
  %423 = vmatpush.msra.mxu0 0.0
  %424 = vmatpush.msra.mxu0 0.0
  %425 = vmatpush.msra.mxu0 0.0
  %426 = vmatpush.msra.mxu0 0.0
  %427 = vmatpush.msra.mxu0 0.0
  %428 = vmatpush.msra.mxu0 0.0
  %429 = vmatpush.msra.mxu0 0.0
  %430 = vmatpush.msra.mxu0 0.0
  %431 = vmatpush.msra.mxu0 0.0
  %432 = vmatpush.msra.mxu0 %v337
  %433 = vmatpush.msra.mxu0 %v336
  %434 = vmatpush.msra.mxu0 %v335
  %435 = vmatpush.msra.mxu0 %v334
  %436 = vmatmul.f32.gmra.mxu0 %v418
  %v437 = vpop.f32.mrf.mxu0
  %v438 = vadd.f32 %v379, %v437
  %439 = vdwg.mxu0
  %v441 = vsel %vm137, %v324, 0
  %443 = vmatpush.msra.mxu0 0.0
  %444 = vmatpush.msra.mxu0 0.0
  %445 = vmatpush.msra.mxu0 0.0
  %446 = vmatpush.msra.mxu0 0.0
  %447 = vmatpush.msra.mxu0 0.0
  %448 = vmatpush.msra.mxu0 0.0
  %449 = vmatpush.msra.mxu0 0.0
  %450 = vmatpush.msra.mxu0 0.0
  %451 = vmatpush.msra.mxu0 0.0
  %452 = vmatpush.msra.mxu0 0.0
  %453 = vmatpush.msra.mxu0 0.0
  %454 = vmatpush.msra.mxu0 0.0
  %455 = vmatpush.msra.mxu0 %v341
  %456 = vmatpush.msra.mxu0 %v340
  %457 = vmatpush.msra.mxu0 %v339
  %458 = vmatpush.msra.mxu0 %v338
  %459 = vmatmul.f32.gmra.mxu0 %v441
  %v460 = vpop.f32.mrf.mxu0
  %v461 = vadd.f32 %v380, %v460
  %462 = vdwg.mxu0
  %v464 = vsel %vm137, %v325, 0
  %466 = vmatpush.msra.mxu0 0.0
  %467 = vmatpush.msra.mxu0 0.0
  %468 = vmatpush.msra.mxu0 0.0
  %469 = vmatpush.msra.mxu0 0.0
  %470 = vmatpush.msra.mxu0 0.0
  %471 = vmatpush.msra.mxu0 0.0
  %472 = vmatpush.msra.mxu0 0.0
  %473 = vmatpush.msra.mxu0 0.0
  %474 = vmatpush.msra.mxu0 0.0
  %475 = vmatpush.msra.mxu0 0.0
  %476 = vmatpush.msra.mxu0 0.0
  %477 = vmatpush.msra.mxu0 0.0
  %478 = vmatpush.msra.mxu0 %v345
  %479 = vmatpush.msra.mxu0 %v344
  %480 = vmatpush.msra.mxu0 %v343
  %481 = vmatpush.msra.mxu0 %v342
  %482 = vmatmul.f32.gmra.mxu0 %v464
  %v483 = vpop.f32.mrf.mxu0
  %v484 = vadd.f32 %v381, %v483
  %485 = vdwg.mxu0
  %v487 = vsel %vm137, %v326, 0
  %489 = vmatpush.msra.mxu0 0.0
  %490 = vmatpush.msra.mxu0 0.0
  %491 = vmatpush.msra.mxu0 0.0
  %492 = vmatpush.msra.mxu0 0.0
  %493 = vmatpush.msra.mxu0 0.0
  %494 = vmatpush.msra.mxu0 0.0
  %495 = vmatpush.msra.mxu0 0.0
  %496 = vmatpush.msra.mxu0 0.0
  %497 = vmatpush.msra.mxu0 0.0
  %498 = vmatpush.msra.mxu0 0.0
  %499 = vmatpush.msra.mxu0 0.0
  %500 = vmatpush.msra.mxu0 0.0
  %501 = vmatpush.msra.mxu0 %v349
  %502 = vmatpush.msra.mxu0 %v348
  %503 = vmatpush.msra.mxu0 %v347
  %504 = vmatpush.msra.mxu0 %v346
  %505 = vmatmul.f32.gmra.mxu0 %v487
  %v506 = vpop.f32.mrf.mxu0
  %v507 = vadd.f32 %v382, %v506
  %508 = vdwg.mxu0
  %v510 = vsel %vm137, %v327, 0
  %512 = vmatpush.msra.mxu0 0.0
  %513 = vmatpush.msra.mxu0 0.0
  %514 = vmatpush.msra.mxu0 0.0
  %515 = vmatpush.msra.mxu0 0.0
  %516 = vmatpush.msra.mxu0 0.0
  %517 = vmatpush.msra.mxu0 0.0
  %518 = vmatpush.msra.mxu0 0.0
  %519 = vmatpush.msra.mxu0 0.0
  %520 = vmatpush.msra.mxu0 0.0
  %521 = vmatpush.msra.mxu0 0.0
  %522 = vmatpush.msra.mxu0 0.0
  %523 = vmatpush.msra.mxu0 0.0
  %524 = vmatpush.msra.mxu0 %v353
  %525 = vmatpush.msra.mxu0 %v352
  %526 = vmatpush.msra.mxu0 %v351
  %527 = vmatpush.msra.mxu0 %v350
  %528 = vmatmul.f32.gmra.mxu0 %v510
  %v529 = vpop.f32.mrf.mxu0
  %v530 = vadd.f32 %v383, %v529
  %531 = vdwg.mxu0
  %v533 = vsel %vm137, %v328, 0
  %535 = vmatpush.msra.mxu0 0.0
  %536 = vmatpush.msra.mxu0 0.0
  %537 = vmatpush.msra.mxu0 0.0
  %538 = vmatpush.msra.mxu0 0.0
  %539 = vmatpush.msra.mxu0 0.0
  %540 = vmatpush.msra.mxu0 0.0
  %541 = vmatpush.msra.mxu0 0.0
  %542 = vmatpush.msra.mxu0 0.0
  %543 = vmatpush.msra.mxu0 0.0
  %544 = vmatpush.msra.mxu0 0.0
  %545 = vmatpush.msra.mxu0 0.0
  %546 = vmatpush.msra.mxu0 0.0
  %547 = vmatpush.msra.mxu0 %v357
  %548 = vmatpush.msra.mxu0 %v356
  %549 = vmatpush.msra.mxu0 %v355
  %550 = vmatpush.msra.mxu0 %v354
  %551 = vmatmul.f32.gmra.mxu0 %v533
  %v552 = vpop.f32.mrf.mxu0
  %v553 = vadd.f32 %v384, %v552
  %554 = vdwg.mxu0
  %v556 = vsel %vm137, %v329, 0
  %558 = vmatpush.msra.mxu0 0.0
  %559 = vmatpush.msra.mxu0 0.0
  %560 = vmatpush.msra.mxu0 0.0
  %561 = vmatpush.msra.mxu0 0.0
  %562 = vmatpush.msra.mxu0 0.0
  %563 = vmatpush.msra.mxu0 0.0
  %564 = vmatpush.msra.mxu0 0.0
  %565 = vmatpush.msra.mxu0 0.0
  %566 = vmatpush.msra.mxu0 0.0
  %567 = vmatpush.msra.mxu0 0.0
  %568 = vmatpush.msra.mxu0 0.0
  %569 = vmatpush.msra.mxu0 0.0
  %570 = vmatpush.msra.mxu0 %v361
  %571 = vmatpush.msra.mxu0 %v360
  %572 = vmatpush.msra.mxu0 %v359
  %573 = vmatpush.msra.mxu0 %v358
  %574 = vmatmul.f32.gmra.mxu0 %v556
  %v575 = vpop.f32.mrf.mxu0
  %v576 = vadd.f32 %v385, %v575
  %577 = vdwg.mxu0
  %v578 = vld [vmem:[%s2] sm:$0xff]
  %v579 = vld [vmem:[%s2 + $0x8] sm:$0xff]
  %v580 = vld [vmem:[%s2 + $0x10] sm:$0xff]
  %v581 = vld [vmem:[%s2 + $0x18] sm:$0xff]
  %v582 = vld [vmem:[%s2 + $0x20] sm:$0xff]
  %v583 = vld [vmem:[%s2 + $0x28] sm:$0xff]
  %v584 = vld [vmem:[%s2 + $0x30] sm:$0xff]
  %v585 = vld [vmem:[%s2 + $0x38] sm:$0xff]
  %v586 = vld [vmem:[%s8] sm:$0xff]
  %v587 = vld [vmem:[%s8 + $0x8] sm:$0xff]
  %v588 = vld [vmem:[%s8 + $0x10] sm:$0xff]
  %v589 = vld [vmem:[%s8 + $0x18] sm:$0xff]
  %v590 = vld [vmem:[%s8 + $0x20] sm:$0xff]
  %v591 = vld [vmem:[%s8 + $0x28] sm:$0xff]
  %v592 = vld [vmem:[%s8 + $0x30] sm:$0xff]
  %v593 = vld [vmem:[%s8 + $0x38] sm:$0xff]
  %v594 = vld [vmem:[%s8 + $0x40] sm:$0xff]
  %v595 = vld [vmem:[%s8 + $0x48] sm:$0xff]
  %v596 = vld [vmem:[%s8 + $0x50] sm:$0xff]
  %v597 = vld [vmem:[%s8 + $0x58] sm:$0xff]
  %v598 = vld [vmem:[%s8 + $0x60] sm:$0xff]
  %v599 = vld [vmem:[%s8 + $0x68] sm:$0xff]
  %v600 = vld [vmem:[%s8 + $0x70] sm:$0xff]
  %v601 = vld [vmem:[%s8 + $0x78] sm:$0xff]
  %v602 = vld [vmem:[%s8 + $0x80] sm:$0xff]
  %v603 = vld [vmem:[%s8 + $0x88] sm:$0xff]
  %v604 = vld [vmem:[%s8 + $0x90] sm:$0xff]
  %v605 = vld [vmem:[%s8 + $0x98] sm:$0xff]
  %v606 = vld [vmem:[%s8 + $0xa0] sm:$0xff]
  %v607 = vld [vmem:[%s8 + $0xa8] sm:$0xff]
  %v608 = vld [vmem:[%s8 + $0xb0] sm:$0xff]
  %v609 = vld [vmem:[%s8 + $0xb8] sm:$0xff]
  %v610 = vld [vmem:[%s8 + $0xc0] sm:$0xff]
  %v611 = vld [vmem:[%s8 + $0xc8] sm:$0xff]
  %v612 = vld [vmem:[%s8 + $0xd0] sm:$0xff]
  %v613 = vld [vmem:[%s8 + $0xd8] sm:$0xff]
  %v614 = vld [vmem:[%s8 + $0xe0] sm:$0xff]
  %v615 = vld [vmem:[%s8 + $0xe8] sm:$0xff]
  %v616 = vld [vmem:[%s8 + $0xf0] sm:$0xff]
  %v617 = vld [vmem:[%s8 + $0xf8] sm:$0xff]
  %v618 = vld [vmem:[%s9] sm:$0x1]
  %v619 = vld [vmem:[%s9 + $0x1] sm:$0x1]
  %v620 = vld [vmem:[%s9 + $0x2] sm:$0x1]
  %v621 = vld [vmem:[%s9 + $0x3] sm:$0x1]
  %v622 = vld [vmem:[%s9 + $0x4] sm:$0x1]
  %v623 = vld [vmem:[%s9 + $0x5] sm:$0x1]
  %v624 = vld [vmem:[%s9 + $0x6] sm:$0x1]
  %v625 = vld [vmem:[%s9 + $0x7] sm:$0x1]
  %v634 = vperm.slane %v618, 0
  %v635 = vperm.slane %v619, 0
  %v636 = vperm.slane %v620, 0
  %v637 = vperm.slane %v621, 0
  %v638 = vperm.slane %v622, 0
  %v639 = vperm.slane %v623, 0
  %v640 = vperm.slane %v624, 0
  %v641 = vperm.slane %v625, 0
  %v651 = vsel %vm137, %v578, 0
  %653 = vmatpush.msra.mxu0 0.0
  %654 = vmatpush.msra.mxu0 0.0
  %655 = vmatpush.msra.mxu0 0.0
  %656 = vmatpush.msra.mxu0 0.0
  %657 = vmatpush.msra.mxu0 0.0
  %658 = vmatpush.msra.mxu0 0.0
  %659 = vmatpush.msra.mxu0 0.0
  %660 = vmatpush.msra.mxu0 0.0
  %661 = vmatpush.msra.mxu0 0.0
  %662 = vmatpush.msra.mxu0 0.0
  %663 = vmatpush.msra.mxu0 0.0
  %664 = vmatpush.msra.mxu0 0.0
  %665 = vmatpush.msra.mxu0 %v589
  %666 = vmatpush.msra.mxu0 %v588
  %667 = vmatpush.msra.mxu0 %v587
  %668 = vmatpush.msra.mxu0 %v586
  %669 = vmatmul.f32.gmra.mxu0 %v651
  %v670 = vpop.f32.mrf.mxu0
  %v671 = vadd.f32 %v634, %v670
  %672 = vdwg.mxu0
  %v674 = vsel %vm137, %v579, 0
  %676 = vmatpush.msra.mxu0 0.0
  %677 = vmatpush.msra.mxu0 0.0
  %678 = vmatpush.msra.mxu0 0.0
  %679 = vmatpush.msra.mxu0 0.0
  %680 = vmatpush.msra.mxu0 0.0
  %681 = vmatpush.msra.mxu0 0.0
  %682 = vmatpush.msra.mxu0 0.0
  %683 = vmatpush.msra.mxu0 0.0
  %684 = vmatpush.msra.mxu0 0.0
  %685 = vmatpush.msra.mxu0 0.0
  %686 = vmatpush.msra.mxu0 0.0
  %687 = vmatpush.msra.mxu0 0.0
  %688 = vmatpush.msra.mxu0 %v593
  %689 = vmatpush.msra.mxu0 %v592
  %690 = vmatpush.msra.mxu0 %v591
  %691 = vmatpush.msra.mxu0 %v590
  %692 = vmatmul.f32.gmra.mxu0 %v674
  %v693 = vpop.f32.mrf.mxu0
  %v694 = vadd.f32 %v635, %v693
  %695 = vdwg.mxu0
  %v697 = vsel %vm137, %v580, 0
  %699 = vmatpush.msra.mxu0 0.0
  %700 = vmatpush.msra.mxu0 0.0
  %701 = vmatpush.msra.mxu0 0.0
  %702 = vmatpush.msra.mxu0 0.0
  %703 = vmatpush.msra.mxu0 0.0
  %704 = vmatpush.msra.mxu0 0.0
  %705 = vmatpush.msra.mxu0 0.0
  %706 = vmatpush.msra.mxu0 0.0
  %707 = vmatpush.msra.mxu0 0.0
  %708 = vmatpush.msra.mxu0 0.0
  %709 = vmatpush.msra.mxu0 0.0
  %710 = vmatpush.msra.mxu0 0.0
  %711 = vmatpush.msra.mxu0 %v597
  %712 = vmatpush.msra.mxu0 %v596
  %713 = vmatpush.msra.mxu0 %v595
  %714 = vmatpush.msra.mxu0 %v594
  %715 = vmatmul.f32.gmra.mxu0 %v697
  %v716 = vpop.f32.mrf.mxu0
  %v717 = vadd.f32 %v636, %v716
  %718 = vdwg.mxu0
  %v720 = vsel %vm137, %v581, 0
  %722 = vmatpush.msra.mxu0 0.0
  %723 = vmatpush.msra.mxu0 0.0
  %724 = vmatpush.msra.mxu0 0.0
  %725 = vmatpush.msra.mxu0 0.0
  %726 = vmatpush.msra.mxu0 0.0
  %727 = vmatpush.msra.mxu0 0.0
  %728 = vmatpush.msra.mxu0 0.0
  %729 = vmatpush.msra.mxu0 0.0
  %730 = vmatpush.msra.mxu0 0.0
  %731 = vmatpush.msra.mxu0 0.0
  %732 = vmatpush.msra.mxu0 0.0
  %733 = vmatpush.msra.mxu0 0.0
  %734 = vmatpush.msra.mxu0 %v601
  %735 = vmatpush.msra.mxu0 %v600
  %736 = vmatpush.msra.mxu0 %v599
  %737 = vmatpush.msra.mxu0 %v598
  %738 = vmatmul.f32.gmra.mxu0 %v720
  %v739 = vpop.f32.mrf.mxu0
  %v740 = vadd.f32 %v637, %v739
  %741 = vdwg.mxu0
  %v743 = vsel %vm137, %v582, 0
  %745 = vmatpush.msra.mxu0 0.0
  %746 = vmatpush.msra.mxu0 0.0
  %747 = vmatpush.msra.mxu0 0.0
  %748 = vmatpush.msra.mxu0 0.0
  %749 = vmatpush.msra.mxu0 0.0
  %750 = vmatpush.msra.mxu0 0.0
  %751 = vmatpush.msra.mxu0 0.0
  %752 = vmatpush.msra.mxu0 0.0
  %753 = vmatpush.msra.mxu0 0.0
  %754 = vmatpush.msra.mxu0 0.0
  %755 = vmatpush.msra.mxu0 0.0
  %756 = vmatpush.msra.mxu0 0.0
  %757 = vmatpush.msra.mxu0 %v605
  %758 = vmatpush.msra.mxu0 %v604
  %759 = vmatpush.msra.mxu0 %v603
  %760 = vmatpush.msra.mxu0 %v602
  %761 = vmatmul.f32.gmra.mxu0 %v743
  %v762 = vpop.f32.mrf.mxu0
  %v763 = vadd.f32 %v638, %v762
  %764 = vdwg.mxu0
  %v766 = vsel %vm137, %v583, 0
  %768 = vmatpush.msra.mxu0 0.0
  %769 = vmatpush.msra.mxu0 0.0
  %770 = vmatpush.msra.mxu0 0.0
  %771 = vmatpush.msra.mxu0 0.0
  %772 = vmatpush.msra.mxu0 0.0
  %773 = vmatpush.msra.mxu0 0.0
  %774 = vmatpush.msra.mxu0 0.0
  %775 = vmatpush.msra.mxu0 0.0
  %776 = vmatpush.msra.mxu0 0.0
  %777 = vmatpush.msra.mxu0 0.0
  %778 = vmatpush.msra.mxu0 0.0
  %779 = vmatpush.msra.mxu0 0.0
  %780 = vmatpush.msra.mxu0 %v609
  %781 = vmatpush.msra.mxu0 %v608
  %782 = vmatpush.msra.mxu0 %v607
  %783 = vmatpush.msra.mxu0 %v606
  %784 = vmatmul.f32.gmra.mxu0 %v766
  %v785 = vpop.f32.mrf.mxu0
  %v786 = vadd.f32 %v639, %v785
  %787 = vdwg.mxu0
  %v789 = vsel %vm137, %v584, 0
  %791 = vmatpush.msra.mxu0 0.0
  %792 = vmatpush.msra.mxu0 0.0
  %793 = vmatpush.msra.mxu0 0.0
  %794 = vmatpush.msra.mxu0 0.0
  %795 = vmatpush.msra.mxu0 0.0
  %796 = vmatpush.msra.mxu0 0.0
  %797 = vmatpush.msra.mxu0 0.0
  %798 = vmatpush.msra.mxu0 0.0
  %799 = vmatpush.msra.mxu0 0.0
  %800 = vmatpush.msra.mxu0 0.0
  %801 = vmatpush.msra.mxu0 0.0
  %802 = vmatpush.msra.mxu0 0.0
  %803 = vmatpush.msra.mxu0 %v613
  %804 = vmatpush.msra.mxu0 %v612
  %805 = vmatpush.msra.mxu0 %v611
  %806 = vmatpush.msra.mxu0 %v610
  %807 = vmatmul.f32.gmra.mxu0 %v789
  %v808 = vpop.f32.mrf.mxu0
  %v809 = vadd.f32 %v640, %v808
  %810 = vdwg.mxu0
  %v812 = vsel %vm137, %v585, 0
  %814 = vmatpush.msra.mxu0 0.0
  %815 = vmatpush.msra.mxu0 0.0
  %816 = vmatpush.msra.mxu0 0.0
  %817 = vmatpush.msra.mxu0 0.0
  %818 = vmatpush.msra.mxu0 0.0
  %819 = vmatpush.msra.mxu0 0.0
  %820 = vmatpush.msra.mxu0 0.0
  %821 = vmatpush.msra.mxu0 0.0
  %822 = vmatpush.msra.mxu0 0.0
  %823 = vmatpush.msra.mxu0 0.0
  %824 = vmatpush.msra.mxu0 0.0
  %825 = vmatpush.msra.mxu0 0.0
  %826 = vmatpush.msra.mxu0 %v617
  %827 = vmatpush.msra.mxu0 %v616
  %828 = vmatpush.msra.mxu0 %v615
  %829 = vmatpush.msra.mxu0 %v614
  %830 = vmatmul.f32.gmra.mxu0 %v812
  %v831 = vpop.f32.mrf.mxu0
  %v832 = vadd.f32 %v641, %v831
  %833 = vdwg.mxu0
  %v834 = vmul.f32 %v159, 0.35355338
  %v835 = vmul.f32 %v182, 0.35355338
  %v836 = vmul.f32 %v205, 0.35355338
  %v837 = vmul.f32 %v228, 0.35355338
  %v838 = vmul.f32 %v251, 0.35355338
  %v839 = vmul.f32 %v274, 0.35355338
  %v840 = vmul.f32 %v297, 0.35355338
  %v841 = vmul.f32 %v320, 0.35355338
  %vm842 = vcmask 64512
  %v844 = vsel %vm842, %v834, 0
  %v847 = vsel %vm842, %v415, 0
  %849 = vmatpush.xpose.msra.mxu0 0.0
  %850 = vmatpush.xpose.msra.mxu0 0.0
  %851 = vmatpush.xpose.msra.mxu0 0.0
  %852 = vmatpush.xpose.msra.mxu0 0.0
  %853 = vmatpush.xpose.msra.mxu0 0.0
  %854 = vmatpush.xpose.msra.mxu0 0.0
  %855 = vmatpush.xpose.msra.mxu0 0.0
  %856 = vmatpush.xpose.msra.mxu0 0.0
  %857 = vmatpush.xpose.msra.mxu0 0.0
  %858 = vmatpush.xpose.msra.mxu0 0.0
  %859 = vmatpush.xpose.msra.mxu0 0.0
  %860 = vmatpush.xpose.msra.mxu0 0.0
  %861 = vmatpush.xpose.msra.mxu0 0.0
  %862 = vmatpush.xpose.msra.mxu0 0.0
  %863 = vmatpush.xpose.msra.mxu0 0.0
  %864 = vmatpush.xpose.msra.mxu0 %v847
  %865 = vmatmul.f32.gmra.mxu0 %v844
  %v866 = vpop.f32.mrf.mxu0
  %v867 = vadd.f32 0.0, %v866
  %868 = vdwg.mxu0
  %v870 = vsel %vm842, %v835, 0
  %v873 = vsel %vm842, %v438, 0
  %875 = vmatpush.xpose.msra.mxu0 0.0
  %876 = vmatpush.xpose.msra.mxu0 0.0
  %877 = vmatpush.xpose.msra.mxu0 0.0
  %878 = vmatpush.xpose.msra.mxu0 0.0
  %879 = vmatpush.xpose.msra.mxu0 0.0
  %880 = vmatpush.xpose.msra.mxu0 0.0
  %881 = vmatpush.xpose.msra.mxu0 0.0
  %882 = vmatpush.xpose.msra.mxu0 0.0
  %883 = vmatpush.xpose.msra.mxu0 0.0
  %884 = vmatpush.xpose.msra.mxu0 0.0
  %885 = vmatpush.xpose.msra.mxu0 0.0
  %886 = vmatpush.xpose.msra.mxu0 0.0
  %887 = vmatpush.xpose.msra.mxu0 0.0
  %888 = vmatpush.xpose.msra.mxu0 0.0
  %889 = vmatpush.xpose.msra.mxu0 0.0
  %890 = vmatpush.xpose.msra.mxu0 %v873
  %891 = vmatmul.f32.gmra.mxu0 %v870
  %v892 = vpop.f32.mrf.mxu0
  %v893 = vadd.f32 0.0, %v892
  %894 = vdwg.mxu0
  %v896 = vsel %vm842, %v836, 0
  %v899 = vsel %vm842, %v461, 0
  %901 = vmatpush.xpose.msra.mxu0 0.0
  %902 = vmatpush.xpose.msra.mxu0 0.0
  %903 = vmatpush.xpose.msra.mxu0 0.0
  %904 = vmatpush.xpose.msra.mxu0 0.0
  %905 = vmatpush.xpose.msra.mxu0 0.0
  %906 = vmatpush.xpose.msra.mxu0 0.0
  %907 = vmatpush.xpose.msra.mxu0 0.0
  %908 = vmatpush.xpose.msra.mxu0 0.0
  %909 = vmatpush.xpose.msra.mxu0 0.0
  %910 = vmatpush.xpose.msra.mxu0 0.0
  %911 = vmatpush.xpose.msra.mxu0 0.0
  %912 = vmatpush.xpose.msra.mxu0 0.0
  %913 = vmatpush.xpose.msra.mxu0 0.0
  %914 = vmatpush.xpose.msra.mxu0 0.0
  %915 = vmatpush.xpose.msra.mxu0 0.0
  %916 = vmatpush.xpose.msra.mxu0 %v899
  %917 = vmatmul.f32.gmra.mxu0 %v896
  %v918 = vpop.f32.mrf.mxu0
  %v919 = vadd.f32 0.0, %v918
  %920 = vdwg.mxu0
  %v922 = vsel %vm842, %v837, 0
  %v925 = vsel %vm842, %v484, 0
  %927 = vmatpush.xpose.msra.mxu0 0.0
  %928 = vmatpush.xpose.msra.mxu0 0.0
  %929 = vmatpush.xpose.msra.mxu0 0.0
  %930 = vmatpush.xpose.msra.mxu0 0.0
  %931 = vmatpush.xpose.msra.mxu0 0.0
  %932 = vmatpush.xpose.msra.mxu0 0.0
  %933 = vmatpush.xpose.msra.mxu0 0.0
  %934 = vmatpush.xpose.msra.mxu0 0.0
  %935 = vmatpush.xpose.msra.mxu0 0.0
  %936 = vmatpush.xpose.msra.mxu0 0.0
  %937 = vmatpush.xpose.msra.mxu0 0.0
  %938 = vmatpush.xpose.msra.mxu0 0.0
  %939 = vmatpush.xpose.msra.mxu0 0.0
  %940 = vmatpush.xpose.msra.mxu0 0.0
  %941 = vmatpush.xpose.msra.mxu0 0.0
  %942 = vmatpush.xpose.msra.mxu0 %v925
  %943 = vmatmul.f32.gmra.mxu0 %v922
  %v944 = vpop.f32.mrf.mxu0
  %v945 = vadd.f32 0.0, %v944
  %946 = vdwg.mxu0
  %v948 = vsel %vm842, %v838, 0
  %v951 = vsel %vm842, %v507, 0
  %953 = vmatpush.xpose.msra.mxu0 0.0
  %954 = vmatpush.xpose.msra.mxu0 0.0
  %955 = vmatpush.xpose.msra.mxu0 0.0
  %956 = vmatpush.xpose.msra.mxu0 0.0
  %957 = vmatpush.xpose.msra.mxu0 0.0
  %958 = vmatpush.xpose.msra.mxu0 0.0
  %959 = vmatpush.xpose.msra.mxu0 0.0
  %960 = vmatpush.xpose.msra.mxu0 0.0
  %961 = vmatpush.xpose.msra.mxu0 0.0
  %962 = vmatpush.xpose.msra.mxu0 0.0
  %963 = vmatpush.xpose.msra.mxu0 0.0
  %964 = vmatpush.xpose.msra.mxu0 0.0
  %965 = vmatpush.xpose.msra.mxu0 0.0
  %966 = vmatpush.xpose.msra.mxu0 0.0
  %967 = vmatpush.xpose.msra.mxu0 0.0
  %968 = vmatpush.xpose.msra.mxu0 %v951
  %969 = vmatmul.f32.gmra.mxu0 %v948
  %v970 = vpop.f32.mrf.mxu0
  %v971 = vadd.f32 0.0, %v970
  %972 = vdwg.mxu0
  %v974 = vsel %vm842, %v839, 0
  %v977 = vsel %vm842, %v530, 0
  %979 = vmatpush.xpose.msra.mxu0 0.0
  %980 = vmatpush.xpose.msra.mxu0 0.0
  %981 = vmatpush.xpose.msra.mxu0 0.0
  %982 = vmatpush.xpose.msra.mxu0 0.0
  %983 = vmatpush.xpose.msra.mxu0 0.0
  %984 = vmatpush.xpose.msra.mxu0 0.0
  %985 = vmatpush.xpose.msra.mxu0 0.0
  %986 = vmatpush.xpose.msra.mxu0 0.0
  %987 = vmatpush.xpose.msra.mxu0 0.0
  %988 = vmatpush.xpose.msra.mxu0 0.0
  %989 = vmatpush.xpose.msra.mxu0 0.0
  %990 = vmatpush.xpose.msra.mxu0 0.0
  %991 = vmatpush.xpose.msra.mxu0 0.0
  %992 = vmatpush.xpose.msra.mxu0 0.0
  %993 = vmatpush.xpose.msra.mxu0 0.0
  %994 = vmatpush.xpose.msra.mxu0 %v977
  %995 = vmatmul.f32.gmra.mxu0 %v974
  %v996 = vpop.f32.mrf.mxu0
  %v997 = vadd.f32 0.0, %v996
  %998 = vdwg.mxu0
  %v1000 = vsel %vm842, %v840, 0
  %v1003 = vsel %vm842, %v553, 0
  %1005 = vmatpush.xpose.msra.mxu0 0.0
  %1006 = vmatpush.xpose.msra.mxu0 0.0
  %1007 = vmatpush.xpose.msra.mxu0 0.0
  %1008 = vmatpush.xpose.msra.mxu0 0.0
  %1009 = vmatpush.xpose.msra.mxu0 0.0
  %1010 = vmatpush.xpose.msra.mxu0 0.0
  %1011 = vmatpush.xpose.msra.mxu0 0.0
  %1012 = vmatpush.xpose.msra.mxu0 0.0
  %1013 = vmatpush.xpose.msra.mxu0 0.0
  %1014 = vmatpush.xpose.msra.mxu0 0.0
  %1015 = vmatpush.xpose.msra.mxu0 0.0
  %1016 = vmatpush.xpose.msra.mxu0 0.0
  %1017 = vmatpush.xpose.msra.mxu0 0.0
  %1018 = vmatpush.xpose.msra.mxu0 0.0
  %1019 = vmatpush.xpose.msra.mxu0 0.0
  %1020 = vmatpush.xpose.msra.mxu0 %v1003
  %1021 = vmatmul.f32.gmra.mxu0 %v1000
  %v1022 = vpop.f32.mrf.mxu0
  %v1023 = vadd.f32 0.0, %v1022
  %1024 = vdwg.mxu0
  %v1026 = vsel %vm842, %v841, 0
  %v1029 = vsel %vm842, %v576, 0
  %1031 = vmatpush.xpose.msra.mxu0 0.0
  %1032 = vmatpush.xpose.msra.mxu0 0.0
  %1033 = vmatpush.xpose.msra.mxu0 0.0
  %1034 = vmatpush.xpose.msra.mxu0 0.0
  %1035 = vmatpush.xpose.msra.mxu0 0.0
  %1036 = vmatpush.xpose.msra.mxu0 0.0
  %1037 = vmatpush.xpose.msra.mxu0 0.0
  %1038 = vmatpush.xpose.msra.mxu0 0.0
  %1039 = vmatpush.xpose.msra.mxu0 0.0
  %1040 = vmatpush.xpose.msra.mxu0 0.0
  %1041 = vmatpush.xpose.msra.mxu0 0.0
  %1042 = vmatpush.xpose.msra.mxu0 0.0
  %1043 = vmatpush.xpose.msra.mxu0 0.0
  %1044 = vmatpush.xpose.msra.mxu0 0.0
  %1045 = vmatpush.xpose.msra.mxu0 0.0
  %1046 = vmatpush.xpose.msra.mxu0 %v1029
  %1047 = vmatmul.f32.gmra.mxu0 %v1026
  %v1048 = vpop.f32.mrf.mxu0
  %v1049 = vadd.f32 0.0, %v1048
  %1050 = vdwg.mxu0
  %v1051 = vsel %vm842, %v867, -inf
  %1052 = vmax.xlane.f32.xlu0 %v1051
  %v1053 = vpop.xlane.xlu0 %1052
  %v1054 = vsel %vm842, %v893, -inf
  %1055 = vmax.xlane.f32.xlu0 %v1054
  %v1056 = vpop.xlane.xlu0 %1055
  %v1057 = vsel %vm842, %v919, -inf
  %1058 = vmax.xlane.f32.xlu0 %v1057
  %v1059 = vpop.xlane.xlu0 %1058
  %v1060 = vsel %vm842, %v945, -inf
  %1061 = vmax.xlane.f32.xlu0 %v1060
  %v1062 = vpop.xlane.xlu0 %1061
  %v1063 = vsel %vm842, %v971, -inf
  %1064 = vmax.xlane.f32.xlu0 %v1063
  %v1065 = vpop.xlane.xlu0 %1064
  %v1066 = vsel %vm842, %v997, -inf
  %1067 = vmax.xlane.f32.xlu0 %v1066
  %v1068 = vpop.xlane.xlu0 %1067
  %v1069 = vsel %vm842, %v1023, -inf
  %1070 = vmax.xlane.f32.xlu0 %v1069
  %v1071 = vpop.xlane.xlu0 %1070
  %v1072 = vsel %vm842, %v1049, -inf
  %1073 = vmax.xlane.f32.xlu0 %v1072
  %v1074 = vpop.xlane.xlu0 %1073
  %v1075 = vsub.f32 %v867, %v1053
  %v1076 = vsub.f32 %v893, %v1056
  %v1077 = vsub.f32 %v919, %v1059
  %v1078 = vsub.f32 %v945, %v1062
  %v1079 = vsub.f32 %v971, %v1065
  %v1080 = vsub.f32 %v997, %v1068
  %v1081 = vsub.f32 %v1023, %v1071
  %v1082 = vsub.f32 %v1049, %v1074
  %v1083 = vmul.f32 %v1075, 1.442695
  %v1084 = vpow.pop %v1083
  %v1085 = vmul.f32 %v1076, 1.442695
  %v1086 = vpow.pop %v1085
  %v1087 = vmul.f32 %v1077, 1.442695
  %v1088 = vpow.pop %v1087
  %v1089 = vmul.f32 %v1078, 1.442695
  %v1090 = vpow.pop %v1089
  %v1091 = vmul.f32 %v1079, 1.442695
  %v1092 = vpow.pop %v1091
  %v1093 = vmul.f32 %v1080, 1.442695
  %v1094 = vpow.pop %v1093
  %v1095 = vmul.f32 %v1081, 1.442695
  %v1096 = vpow.pop %v1095
  %v1097 = vmul.f32 %v1082, 1.442695
  %v1098 = vpow.pop %v1097
  %v1099 = vsel %vm842, %v1084, 0.0
  %1100 = vadd.xlane.f32.xlu0 %v1099
  %v1101 = vpop.xlane.xlu0 %1100
  %v1102 = vsel %vm842, %v1086, 0.0
  %1103 = vadd.xlane.f32.xlu0 %v1102
  %v1104 = vpop.xlane.xlu0 %1103
  %v1105 = vsel %vm842, %v1088, 0.0
  %1106 = vadd.xlane.f32.xlu0 %v1105
  %v1107 = vpop.xlane.xlu0 %1106
  %v1108 = vsel %vm842, %v1090, 0.0
  %1109 = vadd.xlane.f32.xlu0 %v1108
  %v1110 = vpop.xlane.xlu0 %1109
  %v1111 = vsel %vm842, %v1092, 0.0
  %1112 = vadd.xlane.f32.xlu0 %v1111
  %v1113 = vpop.xlane.xlu0 %1112
  %v1114 = vsel %vm842, %v1094, 0.0
  %1115 = vadd.xlane.f32.xlu0 %v1114
  %v1116 = vpop.xlane.xlu0 %1115
  %v1117 = vsel %vm842, %v1096, 0.0
  %1118 = vadd.xlane.f32.xlu0 %v1117
  %v1119 = vpop.xlane.xlu0 %1118
  %v1120 = vsel %vm842, %v1098, 0.0
  %1121 = vadd.xlane.f32.xlu0 %v1120
  %v1122 = vpop.xlane.xlu0 %1121
  %v1123 = vrcp.pop %v1101
  %v1124 = vrcp.pop %v1104
  %v1125 = vrcp.pop %v1107
  %v1126 = vrcp.pop %v1110
  %v1127 = vrcp.pop %v1113
  %v1128 = vrcp.pop %v1116
  %v1129 = vrcp.pop %v1119
  %v1130 = vrcp.pop %v1122
  %v1131 = vmul.f32 %v1084, %v1123
  %v1132 = vmul.f32 %v1086, %v1124
  %v1133 = vmul.f32 %v1088, %v1125
  %v1134 = vmul.f32 %v1090, %v1126
  %v1135 = vmul.f32 %v1092, %v1127
  %v1136 = vmul.f32 %v1094, %v1128
  %v1137 = vmul.f32 %v1096, %v1129
  %v1138 = vmul.f32 %v1098, %v1130
  %v1140 = vsel %vm842, %v1131, 0
  %1142 = vmatpush.msra.mxu0 0.0
  %1143 = vmatpush.msra.mxu0 0.0
  %1144 = vmatpush.msra.mxu0 0.0
  %1145 = vmatpush.msra.mxu0 0.0
  %1146 = vmatpush.msra.mxu0 0.0
  %1147 = vmatpush.msra.mxu0 0.0
  %1148 = vmatpush.msra.mxu0 0.0
  %1149 = vmatpush.msra.mxu0 0.0
  %1150 = vmatpush.msra.mxu0 0.0
  %1151 = vmatpush.msra.mxu0 0.0
  %1152 = vmatpush.msra.mxu0 0.0
  %1153 = vmatpush.msra.mxu0 0.0
  %1154 = vmatpush.msra.mxu0 0.0
  %1155 = vmatpush.msra.mxu0 0.0
  %1156 = vmatpush.msra.mxu0 0.0
  %1157 = vmatpush.msra.mxu0 %v671
  %1158 = vmatmul.f32.gmra.mxu0 %v1140
  %v1159 = vpop.f32.mrf.mxu0
  %v1160 = vadd.f32 0.0, %v1159
  %1161 = vdwg.mxu0
  %v1163 = vsel %vm842, %v1132, 0
  %1165 = vmatpush.msra.mxu0 0.0
  %1166 = vmatpush.msra.mxu0 0.0
  %1167 = vmatpush.msra.mxu0 0.0
  %1168 = vmatpush.msra.mxu0 0.0
  %1169 = vmatpush.msra.mxu0 0.0
  %1170 = vmatpush.msra.mxu0 0.0
  %1171 = vmatpush.msra.mxu0 0.0
  %1172 = vmatpush.msra.mxu0 0.0
  %1173 = vmatpush.msra.mxu0 0.0
  %1174 = vmatpush.msra.mxu0 0.0
  %1175 = vmatpush.msra.mxu0 0.0
  %1176 = vmatpush.msra.mxu0 0.0
  %1177 = vmatpush.msra.mxu0 0.0
  %1178 = vmatpush.msra.mxu0 0.0
  %1179 = vmatpush.msra.mxu0 0.0
  %1180 = vmatpush.msra.mxu0 %v694
  %1181 = vmatmul.f32.gmra.mxu0 %v1163
  %v1182 = vpop.f32.mrf.mxu0
  %v1183 = vadd.f32 0.0, %v1182
  %1184 = vdwg.mxu0
  %v1186 = vsel %vm842, %v1133, 0
  %1188 = vmatpush.msra.mxu0 0.0
  %1189 = vmatpush.msra.mxu0 0.0
  %1190 = vmatpush.msra.mxu0 0.0
  %1191 = vmatpush.msra.mxu0 0.0
  %1192 = vmatpush.msra.mxu0 0.0
  %1193 = vmatpush.msra.mxu0 0.0
  %1194 = vmatpush.msra.mxu0 0.0
  %1195 = vmatpush.msra.mxu0 0.0
  %1196 = vmatpush.msra.mxu0 0.0
  %1197 = vmatpush.msra.mxu0 0.0
  %1198 = vmatpush.msra.mxu0 0.0
  %1199 = vmatpush.msra.mxu0 0.0
  %1200 = vmatpush.msra.mxu0 0.0
  %1201 = vmatpush.msra.mxu0 0.0
  %1202 = vmatpush.msra.mxu0 0.0
  %1203 = vmatpush.msra.mxu0 %v717
  %1204 = vmatmul.f32.gmra.mxu0 %v1186
  %v1205 = vpop.f32.mrf.mxu0
  %v1206 = vadd.f32 0.0, %v1205
  %1207 = vdwg.mxu0
  %v1209 = vsel %vm842, %v1134, 0
  %1211 = vmatpush.msra.mxu0 0.0
  %1212 = vmatpush.msra.mxu0 0.0
  %1213 = vmatpush.msra.mxu0 0.0
  %1214 = vmatpush.msra.mxu0 0.0
  %1215 = vmatpush.msra.mxu0 0.0
  %1216 = vmatpush.msra.mxu0 0.0
  %1217 = vmatpush.msra.mxu0 0.0
  %1218 = vmatpush.msra.mxu0 0.0
  %1219 = vmatpush.msra.mxu0 0.0
  %1220 = vmatpush.msra.mxu0 0.0
  %1221 = vmatpush.msra.mxu0 0.0
  %1222 = vmatpush.msra.mxu0 0.0
  %1223 = vmatpush.msra.mxu0 0.0
  %1224 = vmatpush.msra.mxu0 0.0
  %1225 = vmatpush.msra.mxu0 0.0
  %1226 = vmatpush.msra.mxu0 %v740
  %1227 = vmatmul.f32.gmra.mxu0 %v1209
  %v1228 = vpop.f32.mrf.mxu0
  %v1229 = vadd.f32 0.0, %v1228
  %1230 = vdwg.mxu0
  %v1232 = vsel %vm842, %v1135, 0
  %1234 = vmatpush.msra.mxu0 0.0
  %1235 = vmatpush.msra.mxu0 0.0
  %1236 = vmatpush.msra.mxu0 0.0
  %1237 = vmatpush.msra.mxu0 0.0
  %1238 = vmatpush.msra.mxu0 0.0
  %1239 = vmatpush.msra.mxu0 0.0
  %1240 = vmatpush.msra.mxu0 0.0
  %1241 = vmatpush.msra.mxu0 0.0
  %1242 = vmatpush.msra.mxu0 0.0
  %1243 = vmatpush.msra.mxu0 0.0
  %1244 = vmatpush.msra.mxu0 0.0
  %1245 = vmatpush.msra.mxu0 0.0
  %1246 = vmatpush.msra.mxu0 0.0
  %1247 = vmatpush.msra.mxu0 0.0
  %1248 = vmatpush.msra.mxu0 0.0
  %1249 = vmatpush.msra.mxu0 %v763
  %1250 = vmatmul.f32.gmra.mxu0 %v1232
  %v1251 = vpop.f32.mrf.mxu0
  %v1252 = vadd.f32 0.0, %v1251
  %1253 = vdwg.mxu0
  %v1255 = vsel %vm842, %v1136, 0
  %1257 = vmatpush.msra.mxu0 0.0
  %1258 = vmatpush.msra.mxu0 0.0
  %1259 = vmatpush.msra.mxu0 0.0
  %1260 = vmatpush.msra.mxu0 0.0
  %1261 = vmatpush.msra.mxu0 0.0
  %1262 = vmatpush.msra.mxu0 0.0
  %1263 = vmatpush.msra.mxu0 0.0
  %1264 = vmatpush.msra.mxu0 0.0
  %1265 = vmatpush.msra.mxu0 0.0
  %1266 = vmatpush.msra.mxu0 0.0
  %1267 = vmatpush.msra.mxu0 0.0
  %1268 = vmatpush.msra.mxu0 0.0
  %1269 = vmatpush.msra.mxu0 0.0
  %1270 = vmatpush.msra.mxu0 0.0
  %1271 = vmatpush.msra.mxu0 0.0
  %1272 = vmatpush.msra.mxu0 %v786
  %1273 = vmatmul.f32.gmra.mxu0 %v1255
  %v1274 = vpop.f32.mrf.mxu0
  %v1275 = vadd.f32 0.0, %v1274
  %1276 = vdwg.mxu0
  %v1278 = vsel %vm842, %v1137, 0
  %1280 = vmatpush.msra.mxu0 0.0
  %1281 = vmatpush.msra.mxu0 0.0
  %1282 = vmatpush.msra.mxu0 0.0
  %1283 = vmatpush.msra.mxu0 0.0
  %1284 = vmatpush.msra.mxu0 0.0
  %1285 = vmatpush.msra.mxu0 0.0
  %1286 = vmatpush.msra.mxu0 0.0
  %1287 = vmatpush.msra.mxu0 0.0
  %1288 = vmatpush.msra.mxu0 0.0
  %1289 = vmatpush.msra.mxu0 0.0
  %1290 = vmatpush.msra.mxu0 0.0
  %1291 = vmatpush.msra.mxu0 0.0
  %1292 = vmatpush.msra.mxu0 0.0
  %1293 = vmatpush.msra.mxu0 0.0
  %1294 = vmatpush.msra.mxu0 0.0
  %1295 = vmatpush.msra.mxu0 %v809
  %1296 = vmatmul.f32.gmra.mxu0 %v1278
  %v1297 = vpop.f32.mrf.mxu0
  %v1298 = vadd.f32 0.0, %v1297
  %1299 = vdwg.mxu0
  %v1301 = vsel %vm842, %v1138, 0
  %1303 = vmatpush.msra.mxu0 0.0
  %1304 = vmatpush.msra.mxu0 0.0
  %1305 = vmatpush.msra.mxu0 0.0
  %1306 = vmatpush.msra.mxu0 0.0
  %1307 = vmatpush.msra.mxu0 0.0
  %1308 = vmatpush.msra.mxu0 0.0
  %1309 = vmatpush.msra.mxu0 0.0
  %1310 = vmatpush.msra.mxu0 0.0
  %1311 = vmatpush.msra.mxu0 0.0
  %1312 = vmatpush.msra.mxu0 0.0
  %1313 = vmatpush.msra.mxu0 0.0
  %1314 = vmatpush.msra.mxu0 0.0
  %1315 = vmatpush.msra.mxu0 0.0
  %1316 = vmatpush.msra.mxu0 0.0
  %1317 = vmatpush.msra.mxu0 0.0
  %1318 = vmatpush.msra.mxu0 %v832
  %1319 = vmatmul.f32.gmra.mxu0 %v1301
  %v1320 = vpop.f32.mrf.mxu0
  %v1321 = vadd.f32 0.0, %v1320
  %1322 = vdwg.mxu0
  %v1323 = vld [vmem:[%s10] sm:$0xff]
  %v1324 = vld [vmem:[%s10 + $0x8] sm:$0xff]
  %v1325 = vld [vmem:[%s10 + $0x10] sm:$0xff]
  %v1326 = vld [vmem:[%s10 + $0x18] sm:$0xff]
  %v1327 = vld [vmem:[%s10 + $0x20] sm:$0xff]
  %v1328 = vld [vmem:[%s10 + $0x28] sm:$0xff]
  %v1329 = vld [vmem:[%s10 + $0x30] sm:$0xff]
  %v1330 = vld [vmem:[%s10 + $0x38] sm:$0xff]
  %v1332 = vsel %vm842, %v1160, 0
  %1334 = vmatpush.msra.mxu0 0.0
  %1335 = vmatpush.msra.mxu0 0.0
  %1336 = vmatpush.msra.mxu0 0.0
  %1337 = vmatpush.msra.mxu0 0.0
  %1338 = vmatpush.msra.mxu0 0.0
  %1339 = vmatpush.msra.mxu0 0.0
  %1340 = vmatpush.msra.mxu0 0.0
  %1341 = vmatpush.msra.mxu0 0.0
  %1342 = vmatpush.msra.mxu0 0.0
  %1343 = vmatpush.msra.mxu0 0.0
  %1344 = vmatpush.msra.mxu0 0.0
  %1345 = vmatpush.msra.mxu0 0.0
  %1346 = vmatpush.msra.mxu0 0.0
  %1347 = vmatpush.msra.mxu0 0.0
  %1348 = vmatpush.msra.mxu0 0.0
  %1349 = vmatpush.msra.mxu0 %v1323
  %1350 = vmatmul.f32.gmra.mxu0 %v1332
  %v1351 = vpop.f32.mrf.mxu0
  %v1352 = vadd.f32 0.0, %v1351
  %1353 = vdwg.mxu0
  %v1355 = vsel %vm842, %v1183, 0
  %1357 = vmatpush.msra.mxu0 0.0
  %1358 = vmatpush.msra.mxu0 0.0
  %1359 = vmatpush.msra.mxu0 0.0
  %1360 = vmatpush.msra.mxu0 0.0
  %1361 = vmatpush.msra.mxu0 0.0
  %1362 = vmatpush.msra.mxu0 0.0
  %1363 = vmatpush.msra.mxu0 0.0
  %1364 = vmatpush.msra.mxu0 0.0
  %1365 = vmatpush.msra.mxu0 0.0
  %1366 = vmatpush.msra.mxu0 0.0
  %1367 = vmatpush.msra.mxu0 0.0
  %1368 = vmatpush.msra.mxu0 0.0
  %1369 = vmatpush.msra.mxu0 0.0
  %1370 = vmatpush.msra.mxu0 0.0
  %1371 = vmatpush.msra.mxu0 0.0
  %1372 = vmatpush.msra.mxu0 %v1324
  %1373 = vmatmul.f32.gmra.mxu0 %v1355
  %v1374 = vpop.f32.mrf.mxu0
  %v1375 = vadd.f32 0.0, %v1374
  %1376 = vdwg.mxu0
  %v1378 = vsel %vm842, %v1206, 0
  %1380 = vmatpush.msra.mxu0 0.0
  %1381 = vmatpush.msra.mxu0 0.0
  %1382 = vmatpush.msra.mxu0 0.0
  %1383 = vmatpush.msra.mxu0 0.0
  %1384 = vmatpush.msra.mxu0 0.0
  %1385 = vmatpush.msra.mxu0 0.0
  %1386 = vmatpush.msra.mxu0 0.0
  %1387 = vmatpush.msra.mxu0 0.0
  %1388 = vmatpush.msra.mxu0 0.0
  %1389 = vmatpush.msra.mxu0 0.0
  %1390 = vmatpush.msra.mxu0 0.0
  %1391 = vmatpush.msra.mxu0 0.0
  %1392 = vmatpush.msra.mxu0 0.0
  %1393 = vmatpush.msra.mxu0 0.0
  %1394 = vmatpush.msra.mxu0 0.0
  %1395 = vmatpush.msra.mxu0 %v1325
  %1396 = vmatmul.f32.gmra.mxu0 %v1378
  %v1397 = vpop.f32.mrf.mxu0
  %v1398 = vadd.f32 0.0, %v1397
  %1399 = vdwg.mxu0
  %v1401 = vsel %vm842, %v1229, 0
  %1403 = vmatpush.msra.mxu0 0.0
  %1404 = vmatpush.msra.mxu0 0.0
  %1405 = vmatpush.msra.mxu0 0.0
  %1406 = vmatpush.msra.mxu0 0.0
  %1407 = vmatpush.msra.mxu0 0.0
  %1408 = vmatpush.msra.mxu0 0.0
  %1409 = vmatpush.msra.mxu0 0.0
  %1410 = vmatpush.msra.mxu0 0.0
  %1411 = vmatpush.msra.mxu0 0.0
  %1412 = vmatpush.msra.mxu0 0.0
  %1413 = vmatpush.msra.mxu0 0.0
  %1414 = vmatpush.msra.mxu0 0.0
  %1415 = vmatpush.msra.mxu0 0.0
  %1416 = vmatpush.msra.mxu0 0.0
  %1417 = vmatpush.msra.mxu0 0.0
  %1418 = vmatpush.msra.mxu0 %v1326
  %1419 = vmatmul.f32.gmra.mxu0 %v1401
  %v1420 = vpop.f32.mrf.mxu0
  %v1421 = vadd.f32 0.0, %v1420
  %1422 = vdwg.mxu0
  %v1424 = vsel %vm842, %v1252, 0
  %1426 = vmatpush.msra.mxu0 0.0
  %1427 = vmatpush.msra.mxu0 0.0
  %1428 = vmatpush.msra.mxu0 0.0
  %1429 = vmatpush.msra.mxu0 0.0
  %1430 = vmatpush.msra.mxu0 0.0
  %1431 = vmatpush.msra.mxu0 0.0
  %1432 = vmatpush.msra.mxu0 0.0
  %1433 = vmatpush.msra.mxu0 0.0
  %1434 = vmatpush.msra.mxu0 0.0
  %1435 = vmatpush.msra.mxu0 0.0
  %1436 = vmatpush.msra.mxu0 0.0
  %1437 = vmatpush.msra.mxu0 0.0
  %1438 = vmatpush.msra.mxu0 0.0
  %1439 = vmatpush.msra.mxu0 0.0
  %1440 = vmatpush.msra.mxu0 0.0
  %1441 = vmatpush.msra.mxu0 %v1327
  %1442 = vmatmul.f32.gmra.mxu0 %v1424
  %v1443 = vpop.f32.mrf.mxu0
  %v1444 = vadd.f32 0.0, %v1443
  %1445 = vdwg.mxu0
  %v1447 = vsel %vm842, %v1275, 0
  %1449 = vmatpush.msra.mxu0 0.0
  %1450 = vmatpush.msra.mxu0 0.0
  %1451 = vmatpush.msra.mxu0 0.0
  %1452 = vmatpush.msra.mxu0 0.0
  %1453 = vmatpush.msra.mxu0 0.0
  %1454 = vmatpush.msra.mxu0 0.0
  %1455 = vmatpush.msra.mxu0 0.0
  %1456 = vmatpush.msra.mxu0 0.0
  %1457 = vmatpush.msra.mxu0 0.0
  %1458 = vmatpush.msra.mxu0 0.0
  %1459 = vmatpush.msra.mxu0 0.0
  %1460 = vmatpush.msra.mxu0 0.0
  %1461 = vmatpush.msra.mxu0 0.0
  %1462 = vmatpush.msra.mxu0 0.0
  %1463 = vmatpush.msra.mxu0 0.0
  %1464 = vmatpush.msra.mxu0 %v1328
  %1465 = vmatmul.f32.gmra.mxu0 %v1447
  %v1466 = vpop.f32.mrf.mxu0
  %v1467 = vadd.f32 0.0, %v1466
  %1468 = vdwg.mxu0
  %v1470 = vsel %vm842, %v1298, 0
  %1472 = vmatpush.msra.mxu0 0.0
  %1473 = vmatpush.msra.mxu0 0.0
  %1474 = vmatpush.msra.mxu0 0.0
  %1475 = vmatpush.msra.mxu0 0.0
  %1476 = vmatpush.msra.mxu0 0.0
  %1477 = vmatpush.msra.mxu0 0.0
  %1478 = vmatpush.msra.mxu0 0.0
  %1479 = vmatpush.msra.mxu0 0.0
  %1480 = vmatpush.msra.mxu0 0.0
  %1481 = vmatpush.msra.mxu0 0.0
  %1482 = vmatpush.msra.mxu0 0.0
  %1483 = vmatpush.msra.mxu0 0.0
  %1484 = vmatpush.msra.mxu0 0.0
  %1485 = vmatpush.msra.mxu0 0.0
  %1486 = vmatpush.msra.mxu0 0.0
  %1487 = vmatpush.msra.mxu0 %v1329
  %1488 = vmatmul.f32.gmra.mxu0 %v1470
  %v1489 = vpop.f32.mrf.mxu0
  %v1490 = vadd.f32 0.0, %v1489
  %1491 = vdwg.mxu0
  %v1493 = vsel %vm842, %v1321, 0
  %1495 = vmatpush.msra.mxu0 0.0
  %1496 = vmatpush.msra.mxu0 0.0
  %1497 = vmatpush.msra.mxu0 0.0
  %1498 = vmatpush.msra.mxu0 0.0
  %1499 = vmatpush.msra.mxu0 0.0
  %1500 = vmatpush.msra.mxu0 0.0
  %1501 = vmatpush.msra.mxu0 0.0
  %1502 = vmatpush.msra.mxu0 0.0
  %1503 = vmatpush.msra.mxu0 0.0
  %1504 = vmatpush.msra.mxu0 0.0
  %1505 = vmatpush.msra.mxu0 0.0
  %1506 = vmatpush.msra.mxu0 0.0
  %1507 = vmatpush.msra.mxu0 0.0
  %1508 = vmatpush.msra.mxu0 0.0
  %1509 = vmatpush.msra.mxu0 0.0
  %1510 = vmatpush.msra.mxu0 %v1330
  %1511 = vmatmul.f32.gmra.mxu0 %v1493
  %v1512 = vpop.f32.mrf.mxu0
  %v1513 = vadd.f32 0.0, %v1512
  %1514 = vdwg.mxu0
  %v1515 = vadd.f32 %v1352, %v1375
  %v1516 = vadd.f32 %v1444, %v1467
  %v1517 = vadd.f32 %v1515, %v1398
  %v1518 = vadd.f32 %v1516, %v1490
  %v1519 = vadd.f32 %v1517, %v1421
  %v1520 = vadd.f32 %v1518, %v1513
  %v1521 = vld [vmem:[%s11] sm:$0x1]
  %v1523 = vperm.slane %v1521, 0
  %v1525 = vadd.f32 %v1519, %v1523
  %v1526 = vadd.f32 %v1520, %v1523
  %v1527 = vld [vmem:[%s3] sm:$0xff]
  %v1528 = vld [vmem:[%s3 + $0x8] sm:$0xff]
  %v1529 = vadd.f32 %v1527, %v1525
  %v1530 = vadd.f32 %v1528, %v1526
  %v1531 = vld [vmem:[%s16] sm:$0x1]
  %v1532 = vld [vmem:[%s17] sm:$0x1]
  %v1533 = vsel %vm137, %v1529, 0.0
  %1534 = vadd.xlane.f32.xlu0 %v1533
  %v1535 = vpop.xlane.xlu0 %1534
  %v1536 = vsel %vm137, %v1530, 0.0
  %1537 = vadd.xlane.f32.xlu0 %v1536
  %v1538 = vpop.xlane.xlu0 %1537
  %v1539 = vrcp.pop 32.0
  %v1540 = vmul.f32 32.0, %v1539
  %v1541 = vsub.f32 1.0, %v1540
  %v1542 = vmul.f32 %v1539, %v1541
  %v1543 = vadd.f32 %v1539, %v1542
  %vm1544 = vweird.f32 %v1539
  %v1545 = vsel %vm1544, %v1539, %v1543
  %v1546 = vmul.f32 %v1535, %v1545
  %v1547 = vmul.f32 %v1538, %v1545
  %v1548 = vsub.f32 %v1529, %v1546
  %v1549 = vsub.f32 %v1530, %v1547
  %v1550 = vmul.f32 %v1548, %v1548
  %v1551 = vmul.f32 %v1549, %v1549
  %v1552 = vsel %vm137, %v1550, 0.0
  %1553 = vadd.xlane.f32.xlu0 %v1552
  %v1554 = vpop.xlane.xlu0 %1553
  %v1555 = vsel %vm137, %v1551, 0.0
  %1556 = vadd.xlane.f32.xlu0 %v1555
  %v1557 = vpop.xlane.xlu0 %1556
  %v1558 = vmul.f32 %v1554, %v1545
  %v1559 = vmul.f32 %v1557, %v1545
  %v1560 = vadd.f32 %v1558, 1e-05
  %v1561 = vadd.f32 %v1559, 1e-05
  %v1562 = vrsqrt.pop %v1560
  %v1563 = vmul.f32 %v1562, %v1560
  %v1564 = vmul.f32 %v1563, %v1562
  %v1565 = vmul.f32 0.5, %v1564
  %v1566 = vsub.f32 1.5, %v1565
  %v1567 = vmul.f32 %v1562, %v1566
  %vm1568 = vweird.f32 %v1560
  %vm1569 = vweird.f32 %v1562
  %vm1570 = vmor %vm1568, %vm1569
  %v1571 = vsel %vm1570, %v1562, %v1567
  %v1572 = vrsqrt.pop %v1561
  %v1573 = vmul.f32 %v1572, %v1561
  %v1574 = vmul.f32 %v1573, %v1572
  %v1575 = vmul.f32 0.5, %v1574
  %v1576 = vsub.f32 1.5, %v1575
  %v1577 = vmul.f32 %v1572, %v1576
  %vm1578 = vweird.f32 %v1561
  %vm1579 = vweird.f32 %v1572
  %vm1580 = vmor %vm1578, %vm1579
  %v1581 = vsel %vm1580, %v1572, %v1577
  %v1582 = vmul.f32 %v1548, %v1571
  %v1583 = vmul.f32 %v1549, %v1581
  %v1585 = vperm.slane %v1531, 0
  %v1587 = vmul.f32 %v1582, %v1585
  %v1588 = vmul.f32 %v1583, %v1585
  %v1590 = vperm.slane %v1532, 0
  %v1592 = vadd.f32 %v1587, %v1590
  %v1593 = vadd.f32 %v1588, %v1590
  %v1594 = vld [vmem:[%s12] sm:$0xff]
  %v1595 = vld [vmem:[%s12 + $0x8] sm:$0xff]
  %v1596 = vld [vmem:[%s12 + $0x10] sm:$0xff]
  %v1597 = vld [vmem:[%s12 + $0x18] sm:$0xff]
  %v1598 = vld [vmem:[%s12 + $0x20] sm:$0xff]
  %v1599 = vld [vmem:[%s12 + $0x28] sm:$0xff]
  %v1600 = vld [vmem:[%s12 + $0x30] sm:$0xff]
  %v1601 = vld [vmem:[%s12 + $0x38] sm:$0xff]
  %v1602 = vld [vmem:[%s13] sm:$0x1]
  %v1604 = vperm.slane %v1602, 0
  %v1607 = vsel %vm137, %v1592, 0
  %1609 = vmatpush.msra.mxu0 0.0
  %1610 = vmatpush.msra.mxu0 0.0
  %1611 = vmatpush.msra.mxu0 0.0
  %1612 = vmatpush.msra.mxu0 0.0
  %1613 = vmatpush.msra.mxu0 0.0
  %1614 = vmatpush.msra.mxu0 0.0
  %1615 = vmatpush.msra.mxu0 0.0
  %1616 = vmatpush.msra.mxu0 0.0
  %1617 = vmatpush.msra.mxu0 0.0
  %1618 = vmatpush.msra.mxu0 0.0
  %1619 = vmatpush.msra.mxu0 0.0
  %1620 = vmatpush.msra.mxu0 0.0
  %1621 = vmatpush.msra.mxu0 %v1597
  %1622 = vmatpush.msra.mxu0 %v1596
  %1623 = vmatpush.msra.mxu0 %v1595
  %1624 = vmatpush.msra.mxu0 %v1594
  %1625 = vmatmul.f32.gmra.mxu0 %v1607
  %v1626 = vpop.f32.mrf.mxu0
  %v1627 = vadd.f32 %v1604, %v1626
  %1628 = vdwg.mxu0
  %v1630 = vsel %vm137, %v1593, 0
  %1632 = vmatpush.msra.mxu0 0.0
  %1633 = vmatpush.msra.mxu0 0.0
  %1634 = vmatpush.msra.mxu0 0.0
  %1635 = vmatpush.msra.mxu0 0.0
  %1636 = vmatpush.msra.mxu0 0.0
  %1637 = vmatpush.msra.mxu0 0.0
  %1638 = vmatpush.msra.mxu0 0.0
  %1639 = vmatpush.msra.mxu0 0.0
  %1640 = vmatpush.msra.mxu0 0.0
  %1641 = vmatpush.msra.mxu0 0.0
  %1642 = vmatpush.msra.mxu0 0.0
  %1643 = vmatpush.msra.mxu0 0.0
  %1644 = vmatpush.msra.mxu0 %v1601
  %1645 = vmatpush.msra.mxu0 %v1600
  %1646 = vmatpush.msra.mxu0 %v1599
  %1647 = vmatpush.msra.mxu0 %v1598
  %1648 = vmatmul.f32.gmra.mxu0 %v1630
  %v1649 = vpop.f32.mrf.mxu0
  %v1650 = vadd.f32 %v1604, %v1649
  %1651 = vdwg.mxu0
  %v1652 = vmax.f32 %v1627, 0.0
  %v1653 = vmax.f32 %v1650, 0.0
  %v1654 = vld [vmem:[%s14] sm:$0xff]
  %v1655 = vld [vmem:[%s14 + $0x8] sm:$0xff]
  %v1656 = vld [vmem:[%s14 + $0x10] sm:$0xff]
  %v1657 = vld [vmem:[%s14 + $0x18] sm:$0xff]
  %v1658 = vld [vmem:[%s14 + $0x20] sm:$0xff]
  %v1659 = vld [vmem:[%s14 + $0x28] sm:$0xff]
  %v1660 = vld [vmem:[%s14 + $0x30] sm:$0xff]
  %v1661 = vld [vmem:[%s14 + $0x38] sm:$0xff]
  %v1662 = vld [vmem:[%s14 + $0x40] sm:$0xff]
  %v1663 = vld [vmem:[%s14 + $0x48] sm:$0xff]
  %v1664 = vld [vmem:[%s14 + $0x50] sm:$0xff]
  %v1665 = vld [vmem:[%s14 + $0x58] sm:$0xff]
  %v1666 = vld [vmem:[%s14 + $0x60] sm:$0xff]
  %v1667 = vld [vmem:[%s14 + $0x68] sm:$0xff]
  %v1668 = vld [vmem:[%s14 + $0x70] sm:$0xff]
  %v1669 = vld [vmem:[%s14 + $0x78] sm:$0xff]
  %v1670 = vld [vmem:[%s15] sm:$0x1]
  %v1672 = vperm.slane %v1670, 0
  %vm1674 = vcmask 523264
  %v1676 = vsel %vm1674, %v1652, 0
  %1678 = vmatpush.msra.mxu0 0.0
  %1679 = vmatpush.msra.mxu0 0.0
  %1680 = vmatpush.msra.mxu0 0.0
  %1681 = vmatpush.msra.mxu0 0.0
  %1682 = vmatpush.msra.mxu0 0.0
  %1683 = vmatpush.msra.mxu0 0.0
  %1684 = vmatpush.msra.mxu0 0.0
  %1685 = vmatpush.msra.mxu0 0.0
  %1686 = vmatpush.msra.mxu0 %v1661
  %1687 = vmatpush.msra.mxu0 %v1660
  %1688 = vmatpush.msra.mxu0 %v1659
  %1689 = vmatpush.msra.mxu0 %v1658
  %1690 = vmatpush.msra.mxu0 %v1657
  %1691 = vmatpush.msra.mxu0 %v1656
  %1692 = vmatpush.msra.mxu0 %v1655
  %1693 = vmatpush.msra.mxu0 %v1654
  %1694 = vmatmul.f32.gmra.mxu0 %v1676
  %v1695 = vpop.f32.mrf.mxu0
  %v1696 = vadd.f32 %v1672, %v1695
  %1697 = vdwg.mxu0
  %v1699 = vsel %vm1674, %v1653, 0
  %1701 = vmatpush.msra.mxu0 0.0
  %1702 = vmatpush.msra.mxu0 0.0
  %1703 = vmatpush.msra.mxu0 0.0
  %1704 = vmatpush.msra.mxu0 0.0
  %1705 = vmatpush.msra.mxu0 0.0
  %1706 = vmatpush.msra.mxu0 0.0
  %1707 = vmatpush.msra.mxu0 0.0
  %1708 = vmatpush.msra.mxu0 0.0
  %1709 = vmatpush.msra.mxu0 %v1669
  %1710 = vmatpush.msra.mxu0 %v1668
  %1711 = vmatpush.msra.mxu0 %v1667
  %1712 = vmatpush.msra.mxu0 %v1666
  %1713 = vmatpush.msra.mxu0 %v1665
  %1714 = vmatpush.msra.mxu0 %v1664
  %1715 = vmatpush.msra.mxu0 %v1663
  %1716 = vmatpush.msra.mxu0 %v1662
  %1717 = vmatmul.f32.gmra.mxu0 %v1699
  %v1718 = vpop.f32.mrf.mxu0
  %v1719 = vadd.f32 %v1672, %v1718
  %1720 = vdwg.mxu0
  %v1721 = vadd.f32 %v1592, %v1696
  %v1722 = vadd.f32 %v1593, %v1719
  %v1723 = vld [vmem:[%s18] sm:$0x1]
  %v1724 = vld [vmem:[%s19] sm:$0x1]
  %v1725 = vsel %vm137, %v1721, 0.0
  %1726 = vadd.xlane.f32.xlu0 %v1725
  %v1727 = vpop.xlane.xlu0 %1726
  %v1728 = vsel %vm137, %v1722, 0.0
  %1729 = vadd.xlane.f32.xlu0 %v1728
  %v1730 = vpop.xlane.xlu0 %1729
  %v1731 = vmul.f32 %v1727, %v1545
  %v1732 = vmul.f32 %v1730, %v1545
  %v1733 = vsub.f32 %v1721, %v1731
  %v1734 = vsub.f32 %v1722, %v1732
  %v1735 = vmul.f32 %v1733, %v1733
  %v1736 = vmul.f32 %v1734, %v1734
  %v1737 = vsel %vm137, %v1735, 0.0
  %1738 = vadd.xlane.f32.xlu0 %v1737
  %v1739 = vpop.xlane.xlu0 %1738
  %v1740 = vsel %vm137, %v1736, 0.0
  %1741 = vadd.xlane.f32.xlu0 %v1740
  %v1742 = vpop.xlane.xlu0 %1741
  %v1743 = vmul.f32 %v1739, %v1545
  %v1744 = vmul.f32 %v1742, %v1545
  %v1745 = vadd.f32 %v1743, 1e-05
  %v1746 = vadd.f32 %v1744, 1e-05
  %v1747 = vrsqrt.pop %v1745
  %v1748 = vmul.f32 %v1747, %v1745
  %v1749 = vmul.f32 %v1748, %v1747
  %v1750 = vmul.f32 0.5, %v1749
  %v1751 = vsub.f32 1.5, %v1750
  %v1752 = vmul.f32 %v1747, %v1751
  %vm1753 = vweird.f32 %v1745
  %vm1754 = vweird.f32 %v1747
  %vm1755 = vmor %vm1753, %vm1754
  %v1756 = vsel %vm1755, %v1747, %v1752
  %v1757 = vrsqrt.pop %v1746
  %v1758 = vmul.f32 %v1757, %v1746
  %v1759 = vmul.f32 %v1758, %v1757
  %v1760 = vmul.f32 0.5, %v1759
  %v1761 = vsub.f32 1.5, %v1760
  %v1762 = vmul.f32 %v1757, %v1761
  %vm1763 = vweird.f32 %v1746
  %vm1764 = vweird.f32 %v1757
  %vm1765 = vmor %vm1763, %vm1764
  %v1766 = vsel %vm1765, %v1757, %v1762
  %v1767 = vmul.f32 %v1733, %v1756
  %v1768 = vmul.f32 %v1734, %v1766
  %v1770 = vperm.slane %v1723, 0
  %v1772 = vmul.f32 %v1767, %v1770
  %v1773 = vmul.f32 %v1768, %v1770
  %v1775 = vperm.slane %v1724, 0
  %v1777 = vadd.f32 %v1772, %v1775
  %v1778 = vadd.f32 %v1773, %v1775
  %1779 = vst.msk [vmem:[%s20] sm:$0xff] %vm137, %v1777
  %1780 = vst.msk [vmem:[%s20 + $0x8] sm:$0xff] %vm137, %v1778
  // Predicated region
  $region82: #{transformer_decoder_layer.1} parent=0 // pred_check
    _
  $region83: #{transformer_decoder_layer.1} parent=0 // pred_check_branch
    %1782 = sbr.rel (0) target = $region85
  $region84: #{transformer_decoder_layer.1} parent=0 // pred_region
    _
  $region85: #{transformer_decoder_layer.1} parent=0 // pred_fallthru
    _
  // Predicated region
  $region86: #{transformer_decoder_layer.1} parent=0 // pred_check
    _
  $region87: #{transformer_decoder_layer.1} parent=0 // pred_check_branch
    %1784 = sbr.rel (0) target = $region89
  $region88: #{transformer_decoder_layer.1} parent=0 // pred_region
    _
  $region89: #{transformer_decoder_layer.1} parent=0 // pred_fallthru
    _

</llo_original>
